<compile_context>
chip_gen: v7x
topology: tpu7x:2x2x1
jax: 0.10.0
libtpu: 0.0.40
codegen_flags: <defaults>
</compile_context>

<pallas_src>
import functools

import jax
import jax.numpy as jnp
import numpy as np
from jax.experimental import pallas as pl
from jax.experimental.pallas import tpu as pltpu


# ---------------------------------------------------------------------------
# DFT matrices (cos / sin parts of exp(-2*pi*i*k*n/N)); symmetric.
# ---------------------------------------------------------------------------
def _dft_matrices(n):
    k = np.arange(n)
    ang = 2.0 * np.pi * np.outer(k, k) / n
    return (jnp.asarray(np.cos(ang), dtype=jnp.float32),
            jnp.asarray(np.sin(ang), dtype=jnp.float32))


# ---------------------------------------------------------------------------
# Polynomial helpers for in-kernel atan2 / cos / sin (VPU + EUP ops only).
# ---------------------------------------------------------------------------
def _atan_unit_poly_coeffs(deg=7):
    # atan(z) = z * P(z^2) for z in [0, 1]; P fit by least squares in u = z^2.
    u = np.linspace(0.0, 1.0, 4001)
    z = np.sqrt(u)
    f = np.where(u > 0.0, np.arctan(z) / np.where(z > 0.0, z, 1.0), 1.0)
    v = np.vander(u, N=deg + 1, increasing=True)
    coef, *_ = np.linalg.lstsq(v, f, rcond=None)
    assert float(np.max(np.abs(v @ coef - f))) < 2e-4
    return [float(c) for c in coef]


_ATAN_COEF = _atan_unit_poly_coeffs()


def _atan_unit(z):
    """atan(z) for z in [0, 1]."""
    u = z * z
    p = _ATAN_COEF[-1]
    for c in reversed(_ATAN_COEF[:-1]):
        p = p * u + c
    return z * p


def _atan2(y, x):
    """Elementwise atan2 matching jnp.arctan2 quadrant conventions (kernel only)."""
    ax = jnp.abs(x)
    ay = jnp.abs(y)
    mx = jnp.maximum(ax, ay)
    mn = jnp.minimum(ax, ay)
    # divide on the EUP (approx reciprocal) so it co-issues with MXU work
    a = _atan_unit(mn * pl.reciprocal(jnp.maximum(mx, 1e-30), approx=True))
    a = jnp.where(ay > ax, 0.5 * np.pi - a, a)
    a = jnp.where(x < 0.0, np.pi - a, a)
    return jnp.where(y < 0.0, -a, a)


def _cos_unit(t):
    """cos(t) for t in [0, 1] (sigmoid output range only); Taylor, |err| < 3e-7."""
    t2 = t * t
    return 1.0 + t2 * (-0.5 + t2 * (1.0 / 24.0 + t2 * (-1.0 / 720.0
                       + t2 * (1.0 / 40320.0))))


def _sin_unit(t):
    """sin(t) for t in [0, 1]; Taylor, |err| < 3e-8."""
    t2 = t * t
    return t * (1.0 + t2 * (-1.0 / 6.0 + t2 * (1.0 / 120.0
                + t2 * (-1.0 / 5040.0 + t2 * (1.0 / 362880.0)))))


# ---------------------------------------------------------------------------
# Fused FPSA kernel: one program = Bt batch elements, slab layout (Bt*H, C*W).
# ---------------------------------------------------------------------------
def _fpsa_kernel(x_ref, lf_ref, cwsw_ref, wf_ref, bf_ref, wp_ref, bp_ref,
                 wc_ref, bc_ref, o_ref, *, bt, h, cw):
    bf16 = jnp.bfloat16
    bth = bt * h

    def mm(a, b):  # bf16 operands, f32 accumulation on the MXU
        return jnp.dot(a, b, preferred_element_type=jnp.float32)

    x = x_ref[...].reshape(bth, cw)           # (Bt*H, C*W) f32, lane-dense
    lf = lf_ref[...]                          # (2*Bt*H, Bt*H) bf16: [kCH; kSH]
    cwsw = cwsw_ref[...]                      # (C*W, 2*C*W)  bf16: [cwb | swb]

    # ---- forward fft2 ------------------------------------------------------
    # one push: rows [:bth] = CH@x (a), rows [bth:] = SH@x (b)   (per image block)
    ab = mm(lf, x.astype(bf16))
    # one push: [[a@cwb, a@swb], [b@cwb, b@swb]]
    pq = mm(ab.astype(bf16), cwsw)
    re = pq[:bth, :cw] - pq[bth:, cw:]
    im = -(pq[:bth, cw:] + pq[bth:, :cw])

    # ---- amp/phase + 1x1 convs (BN folded, eval mode) ----------------------
    amp = jnp.log(1.0 + jnp.sqrt(re * re + im * im))
    phase = _atan2(im, re)
    # wf/bf carry the 1/(H*W) ifft normalisation (ReLU is positively homogeneous)
    amp_attn = jnp.maximum(mm(amp.astype(bf16), wf_ref[...]) + bf_ref[...], 0.0)
    ps = jax.nn.sigmoid(mm(phase.astype(bf16), wp_ref[...]) + bp_ref[...])

    # ps in (0,1): _cos_unit/_sin_unit are only valid on [0,1] — revisit if the
    # phase activation ever changes from sigmoid.
    yr = (amp_attn * _cos_unit(ps)).astype(bf16)
    yi = (amp_attn * _sin_unit(ps)).astype(bf16)

    # ---- inverse fft2 (real part) ------------------------------------------
    # one push: [[CH@yr, CH@yi], [SH@yr, SH@yi]]
    yri = jnp.concatenate([yr, yi], axis=1)   # (Bt*H, 2*C*W)
    m2 = mm(lf, yri)
    mr = m2[:bth, :cw] - m2[bth:, cw:]        # CH@yr - SH@yi
    nmi = -(m2[:bth, cw:] + m2[bth:, :cw])    # -(CH@yi + SH@yr)
    mri = jnp.concatenate([mr.astype(bf16), nmi.astype(bf16)], axis=1)
    # real = mr@cwb - mi@swb  (cwb/swb symmetric), one push contracting lanes
    real = jax.lax.dot_general(mri, cwsw, (((1,), (1,)), ((), ())),
                               preferred_element_type=jnp.float32)

    # ---- residual + combine 1x1 conv ---------------------------------------
    sps = real + x
    out = mm(sps.astype(bf16), wc_ref[...]) + bc_ref[...]
    o_ref[...] = out.reshape(bt, h, cw)


def _pick_bt(b, h, target_rows=256):
    """Largest per-step batch Bt with Bt*H <= target_rows, B % Bt == 0, grid >= 2."""
    divs = [d for d in range(1, b + 1) if b % d == 0 and d * h <= target_rows]
    if not divs:
        divs = [1]
    two_core = [d for d in divs if b // d >= 2]      # keep both TCs busy (megacore)
    return max(two_core) if two_core else max(divs)


# ---------------------------------------------------------------------------
# FPSA forward
# ---------------------------------------------------------------------------
def fpsa_forward(x, params, *, mxu_rows=256):
    # mxu_rows: per-step row target; 256 for v6e/v7x, 128 is enough on v5e.
    B, C, H, W = x.shape
    wf, bf = params["wf"], params["bf"]
    wp, bp = params["wp"], params["bp"]
    wc, bc = params["wc"], params["bc"]
    Co = wf.shape[0]
    assert Co == C, "residual add requires out_channels == in_channels"
    CW = C * W

    bt = _pick_bt(B, H, mxu_rows)
    grid = B // bt

    ch, sh = _dft_matrices(H)
    cwm, swm = _dft_matrices(W)

    # Stacked left row-DFT operand: [kron(I_Bt, CH); kron(I_Bt, SH)].
    eye_bt = jnp.eye(bt, dtype=jnp.float32)
    lf = jnp.concatenate([jnp.kron(eye_bt, ch), jnp.kron(eye_bt, sh)], axis=0)

    # Fused per-channel column-DFT operand: [kron(I_C, CW) | kron(I_C, SW)].
    eye_c = jnp.eye(C, dtype=jnp.float32)
    eye_w = jnp.eye(W, dtype=jnp.float32)
    cwsw = jnp.concatenate([jnp.kron(eye_c, cwm), jnp.kron(eye_c, swm)], axis=1)

    # 1x1 convs (+ folded BN) as lane-dense right matmuls; 1/(H*W) folded into wf/bf.
    inv_hw = 1.0 / float(H * W)
    wf_e = jnp.kron(wf.T, eye_w) * inv_hw     # (C*W, Co*W)
    wp_e = jnp.kron(wp.T, eye_w)
    wc_e = jnp.kron(wc.T, eye_w)
    bf_r = (jnp.repeat(bf, W) * inv_hw).reshape(1, Co * W)
    bp_r = jnp.repeat(bp, W).reshape(1, Co * W)
    bc_r = jnp.repeat(bc, W).reshape(1, Co * W)

    bfl = jnp.bfloat16
    x32 = x.astype(jnp.float32)
    # (B, C, H, W) -> (B, H, C*W): lane-dense slab per batch element.
    # TODO(synk): at large B*C*H*W keep this slab layout end-to-end across adjacent
    # ops (or do the (C,H) swap in-kernel) so the transposes stop costing an HBM
    # round trip.
    x_slab = x32.transpose(0, 2, 1, 3).reshape(B, H, CW)

    def const2(shape):  # constant-index weights: single-buffered (v7x VMEM budget)
        return pl.BlockSpec(shape, lambda i: (0, 0), pipeline_mode=pl.Buffered(1))

    out = pl.pallas_call(
        functools.partial(_fpsa_kernel, bt=bt, h=H, cw=CW),
        grid=(grid,),
        in_specs=[
            pl.BlockSpec((bt, H, CW), lambda i: (i, 0, 0)),
            const2((2 * bt * H, bt * H)),     # lf
            const2((CW, 2 * CW)),             # cwsw
            const2((CW, Co * W)),             # wf_e
            const2((1, Co * W)),              # bf_r
            const2((CW, Co * W)),             # wp_e
            const2((1, Co * W)),              # bp_r
            const2((Co * W, Co * W)),         # wc_e
            const2((1, Co * W)),              # bc_r
        ],
        out_specs=pl.BlockSpec((bt, H, Co * W), lambda i: (i, 0, 0)),
        out_shape=jax.ShapeDtypeStruct((B, H, Co * W), jnp.float32),
        compiler_params=pltpu.CompilerParams(
            dimension_semantics=("parallel",),
            vmem_limit_bytes=32 * 1024 * 1024),
    )(x_slab,
      lf.astype(bfl), cwsw.astype(bfl),
      wf_e.astype(bfl), bf_r,
      wp_e.astype(bfl), bp_r,
      wc_e.astype(bfl), bc_r)

    out = out.reshape(B, H, Co, W).transpose(0, 2, 1, 3)
    return out.astype(x.dtype)


# ---------------------------------------------------------------------------
# Deterministic parameter init (Conv 1x1 weights + eval-mode BN folded in).
# ---------------------------------------------------------------------------
def init_fpsa_params(key, in_channels, out_channels=None, eps=1e-5):
    cin = in_channels
    cout = out_channels or in_channels
    ks = jax.random.split(key, 14)

    def nrm(k, shape, s=1.0):
        return s * jax.random.normal(k, shape, dtype=jnp.float32)

    def fold_bn(w, b, gamma, beta, mean, var):
        s = gamma / jnp.sqrt(var + eps)
        return w * s[:, None], (b - mean) * s + beta

    # freq_attn: Conv2d(cin, cout, 1) -> BatchNorm2d(cout) -> ReLU
    wf = nrm(ks[0], (cout, cin), 1.0 / np.sqrt(cin))
    bf = nrm(ks[1], (cout,), 0.1)
    wf, bf = fold_bn(wf, bf,
                     1.0 + nrm(ks[2], (cout,), 0.1), nrm(ks[3], (cout,), 0.1),
                     nrm(ks[4], (cout,), 0.1),
                     1.0 + jnp.abs(nrm(ks[5], (cout,), 0.1)))

    # phase_attn: Conv2d(cin, cout, 1) -> BatchNorm2d(cout) -> Sigmoid
    wp = nrm(ks[6], (cout, cin), 1.0 / np.sqrt(cin))
    bp = nrm(ks[7], (cout,), 0.1)
    wp, bp = fold_bn(wp, bp,
                     1.0 + nrm(ks[8], (cout,), 0.1), nrm(ks[9], (cout,), 0.1),
                     nrm(ks[10], (cout,), 0.1),
                     1.0 + jnp.abs(nrm(ks[11], (cout,), 0.1)))

    # combine: Conv2d(cout, cout, 1)
    wc = nrm(ks[12], (cout, cout), 1.0 / np.sqrt(cout))
    bc = nrm(ks[13], (cout,), 0.1)

    return dict(wf=wf, bf=bf, wp=wp, bp=bp, wc=wc, bc=bc)


# ---------------------------------------------------------------------------
# Pure-JAX f32 reference (exact transcendentals, HIGHEST-precision einsums).
# ---------------------------------------------------------------------------
def fpsa_reference(x, params):
    B, C, H, W = x.shape
    ch, sh = _dft_matrices(H)
    cwm, swm = _dft_matrices(W)
    wf, bf = params["wf"], params["bf"]
    wp, bp = params["wp"], params["bp"]
    wc, bc = params["wc"], params["bc"]
    hp = jax.lax.Precision.HIGHEST

    def row(m, t):
        return jnp.einsum('uh,bchw->bcuw', m, t, precision=hp)

    def col(t, m):
        return jnp.einsum('bchw,wv->bchv', t, m, precision=hp)

    def conv(t, w, bias):
        return jnp.einsum('oc,bchw->bohw', w, t, precision=hp) \
            + bias[None, :, None, None]

    xf = x.astype(jnp.float32)
    a = row(ch, xf)
    b = row(sh, xf)
    re = col(a, cwm) - col(b, swm)
    im = -(col(a, swm) + col(b, cwm))
    amp = jnp.log1p(jnp.sqrt(re * re + im * im))
    phase = jnp.arctan2(im, re)
    amp_attn = jax.nn.relu(conv(amp, wf, bf))
    phase_shift = jax.nn.sigmoid(conv(phase, wp, bp))
    yr = amp_attn * jnp.cos(phase_shift)
    yi = amp_attn * jnp.sin(phase_shift)
    mr = row(ch, yr) - row(sh, yi)
    mi = row(ch, yi) + row(sh, yr)
    spatial = (col(mr, cwm) - col(mi, swm)) / float(H * W)
    sps = spatial + xf
    return conv(sps, wc, bc).astype(x.dtype)


if __name__ == "__main__":
    key = jax.random.PRNGKey(0)
    kx, kp = jax.random.split(key)

    # C*W = 128 -> lane-dense slabs; B=4 -> Bt=2 per step, grid=2 (megacore).
    B, C, H, W = 4, 8, 16, 16
    x = jax.random.normal(kx, (B, C, H, W), dtype=jnp.float32)
    params = init_fpsa_params(kp, C)

    out = jax.jit(fpsa_forward)(x, params)
    out = jax.block_until_ready(out)

    assert out.shape == (B, C, H, W)
    assert bool(jnp.all(jnp.isfinite(out)))

    ref = fpsa_reference(x, params)
    max_err = float(jnp.max(jnp.abs(out - ref)))
    # Loose tolerance: bf16 MXU operands inside the fused kernel vs an f32
    # HIGHEST-precision XLA reference; the difference is dominated by bf16
    # rounding of the DFT operands/intermediates amplified through the
    # fft2 -> conv -> ifft2 -> conv chain (max over 8K outputs).  Real
    # layout/sign bugs produce O(1)+ errors, so this still catches them.
    assert max_err < 3.0e-1, f"max abs error {max_err}"

    print("KERNEL_OK")
</pallas_src>

<mosaic_0001>
module attributes {stable_mosaic.version = 11 : i64} {
  func.func @_fpsa_kernel(%arg0: i32, %arg1: memref<2x16x128xf32, #tpu.memory_space<vmem>>, %arg2: memref<64x32xbf16, #tpu.memory_space<vmem>>, %arg3: memref<128x256xbf16, #tpu.memory_space<vmem>>, %arg4: memref<128x128xbf16, #tpu.memory_space<vmem>>, %arg5: memref<1x128xf32, #tpu.memory_space<vmem>>, %arg6: memref<128x128xbf16, #tpu.memory_space<vmem>>, %arg7: memref<1x128xf32, #tpu.memory_space<vmem>>, %arg8: memref<128x128xbf16, #tpu.memory_space<vmem>>, %arg9: memref<1x128xf32, #tpu.memory_space<vmem>>, %arg10: memref<2x16x128xf32, #tpu.memory_space<vmem>>) attributes {dimension_semantics = [#tpu.dimension_semantics<parallel>], iteration_bounds = array<i64: 2>, scalar_prefetch = 0 : i64, scratch_operands = 0 : i64, tpu.core_type = #tpu.core_type<tc>, window_params = [{transform_indices = @transform_0, window_bounds = array<i64: 2, 16, 128>}, {pipeline_mode = #tpu.pipeline_mode<synchronous>, transform_indices = @transform_1, window_bounds = array<i64: 64, 32>}, {pipeline_mode = #tpu.pipeline_mode<synchronous>, transform_indices = @transform_2, window_bounds = array<i64: 128, 256>}, {pipeline_mode = #tpu.pipeline_mode<synchronous>, transform_indices = @transform_3, window_bounds = array<i64: 128, 128>}, {pipeline_mode = #tpu.pipeline_mode<synchronous>, transform_indices = @transform_4, window_bounds = array<i64: 1, 128>}, {pipeline_mode = #tpu.pipeline_mode<synchronous>, transform_indices = @transform_5, window_bounds = array<i64: 128, 128>}, {pipeline_mode = #tpu.pipeline_mode<synchronous>, transform_indices = @transform_6, window_bounds = array<i64: 1, 128>}, {pipeline_mode = #tpu.pipeline_mode<synchronous>, transform_indices = @transform_7, window_bounds = array<i64: 128, 128>}, {pipeline_mode = #tpu.pipeline_mode<synchronous>, transform_indices = @transform_8, window_bounds = array<i64: 1, 128>}, {transform_indices = @transform_9, window_bounds = array<i64: 2, 16, 128>}]} {
    %c0 = arith.constant 0 : index
    %c0_0 = arith.constant 0 : index
    %c0_1 = arith.constant 0 : index
    %0 = vector.load %arg1[%c0, %c0_0, %c0_1] : memref<2x16x128xf32, #tpu.memory_space<vmem>>, vector<2x16x128xf32>
    %1 = vector.shape_cast %0 : vector<2x16x128xf32> to vector<32x128xf32>
    %c0_2 = arith.constant 0 : index
    %c0_3 = arith.constant 0 : index
    %2 = vector.load %arg2[%c0_2, %c0_3] : memref<64x32xbf16, #tpu.memory_space<vmem>>, vector<64x32xbf16>
    %c0_4 = arith.constant 0 : index
    %c0_5 = arith.constant 0 : index
    %3 = vector.load %arg3[%c0_4, %c0_5] : memref<128x256xbf16, #tpu.memory_space<vmem>>, vector<128x256xbf16>
    %4 = arith.truncf %1 : vector<32x128xf32> to vector<32x128xbf16>
    %cst = arith.constant dense<0.000000e+00> : vector<64x128xf32>
    %5 = tpu.matmul %2, %4, %cst {dimension_numbers = #tpu.dot_dimension_numbers<[1], [0], [0], [1], [0, 0, 1, 1], [], []>} : vector<64x32xbf16>, vector<32x128xbf16>, vector<64x128xf32> -> vector<64x128xf32>
    %6 = arith.truncf %5 : vector<64x128xf32> to vector<64x128xbf16>
    %cst_6 = arith.constant dense<0.000000e+00> : vector<64x256xf32>
    %7 = tpu.matmul %6, %3, %cst_6 {dimension_numbers = #tpu.dot_dimension_numbers<[1], [0], [0], [1], [0, 0, 1, 1], [], []>} : vector<64x128xbf16>, vector<128x256xbf16>, vector<64x256xf32> -> vector<64x256xf32>
    %8 = vector.extract_strided_slice %7 {offsets = [0, 0], sizes = [32, 128], strides = [1, 1]} : vector<64x256xf32> to vector<32x128xf32>
    %9 = vector.extract_strided_slice %7 {offsets = [32, 128], sizes = [32, 128], strides = [1, 1]} : vector<64x256xf32> to vector<32x128xf32>
    %10 = arith.subf %8, %9 : vector<32x128xf32>
    %11 = vector.extract_strided_slice %7 {offsets = [0, 128], sizes = [32, 128], strides = [1, 1]} : vector<64x256xf32> to vector<32x128xf32>
    %12 = vector.extract_strided_slice %7 {offsets = [32, 0], sizes = [32, 128], strides = [1, 1]} : vector<64x256xf32> to vector<32x128xf32>
    %13 = arith.addf %11, %12 : vector<32x128xf32>
    %cst_7 = arith.constant 0.000000e+00 : f32
    %14 = vector.broadcast %cst_7 : f32 to vector<32x128xf32>
    %15 = arith.subf %14, %13 : vector<32x128xf32>
    %16 = arith.mulf %10, %10 : vector<32x128xf32>
    %17 = arith.mulf %15, %15 : vector<32x128xf32>
    %18 = arith.addf %16, %17 : vector<32x128xf32>
    %19 = math.sqrt %18 : vector<32x128xf32>
    %cst_8 = arith.constant 1.000000e+00 : f32
    %20 = vector.broadcast %cst_8 : f32 to vector<32x128xf32>
    %21 = arith.addf %20, %19 : vector<32x128xf32>
    %22 = math.log %21 : vector<32x128xf32>
    %23 = math.absf %10 : vector<32x128xf32>
    %24 = math.absf %15 : vector<32x128xf32>
    %25 = arith.maximumf %23, %24 : vector<32x128xf32>
    %26 = arith.minimumf %23, %24 : vector<32x128xf32>
    %cst_9 = arith.constant 1.000000e-30 : f32
    %27 = vector.broadcast %cst_9 : f32 to vector<32x128xf32>
    %28 = arith.maximumf %25, %27 : vector<32x128xf32>
    %29 = tpu.reciprocal %28 {approx = true} : vector<32x128xf32> -> vector<32x128xf32>
    %30 = arith.mulf %26, %29 : vector<32x128xf32>
    %31 = arith.mulf %30, %30 : vector<32x128xf32>
    %cst_10 = arith.constant -0.00461117737 : f32
    %32 = vector.broadcast %cst_10 : f32 to vector<32x128xf32>
    %33 = arith.mulf %32, %31 : vector<32x128xf32>
    %cst_11 = arith.constant 0.0238702148 : f32
    %34 = vector.broadcast %cst_11 : f32 to vector<32x128xf32>
    %35 = arith.addf %33, %34 : vector<32x128xf32>
    %36 = arith.mulf %35, %31 : vector<32x128xf32>
    %cst_12 = arith.constant -0.0588038862 : f32
    %37 = vector.broadcast %cst_12 : f32 to vector<32x128xf32>
    %38 = arith.addf %36, %37 : vector<32x128xf32>
    %39 = arith.mulf %38, %31 : vector<32x128xf32>
    %cst_13 = arith.constant 0.0985414981 : f32
    %40 = vector.broadcast %cst_13 : f32 to vector<32x128xf32>
    %41 = arith.addf %39, %40 : vector<32x128xf32>
    %42 = arith.mulf %41, %31 : vector<32x128xf32>
    %cst_14 = arith.constant -0.139918596 : f32
    %43 = vector.broadcast %cst_14 : f32 to vector<32x128xf32>
    %44 = arith.addf %42, %43 : vector<32x128xf32>
    %45 = arith.mulf %44, %31 : vector<32x128xf32>
    %cst_15 = arith.constant 0.199633926 : f32
    %46 = vector.broadcast %cst_15 : f32 to vector<32x128xf32>
    %47 = arith.addf %45, %46 : vector<32x128xf32>
    %48 = arith.mulf %47, %31 : vector<32x128xf32>
    %cst_16 = arith.constant -0.333313763 : f32
    %49 = vector.broadcast %cst_16 : f32 to vector<32x128xf32>
    %50 = arith.addf %48, %49 : vector<32x128xf32>
    %51 = arith.mulf %50, %31 : vector<32x128xf32>
    %cst_17 = arith.constant 0.999999761 : f32
    %52 = vector.broadcast %cst_17 : f32 to vector<32x128xf32>
    %53 = arith.addf %51, %52 : vector<32x128xf32>
    %54 = arith.mulf %30, %53 : vector<32x128xf32>
    %55 = arith.cmpf ogt, %24, %23 : vector<32x128xf32>
    %cst_18 = arith.constant 1.57079637 : f32
    %56 = vector.broadcast %cst_18 : f32 to vector<32x128xf32>
    %57 = arith.subf %56, %54 : vector<32x128xf32>
    %58 = arith.select %55, %57, %54 : vector<32x128xi1>, vector<32x128xf32>
    %cst_19 = arith.constant 0.000000e+00 : f32
    %59 = vector.broadcast %cst_19 : f32 to vector<32x128xf32>
    %60 = arith.cmpf olt, %10, %59 : vector<32x128xf32>
    %cst_20 = arith.constant 3.14159274 : f32
    %61 = vector.broadcast %cst_20 : f32 to vector<32x128xf32>
    %62 = arith.subf %61, %58 : vector<32x128xf32>
    %63 = arith.select %60, %62, %58 : vector<32x128xi1>, vector<32x128xf32>
    %cst_21 = arith.constant 0.000000e+00 : f32
    %64 = vector.broadcast %cst_21 : f32 to vector<32x128xf32>
    %65 = arith.cmpf olt, %15, %64 : vector<32x128xf32>
    %cst_22 = arith.constant 0.000000e+00 : f32
    %66 = vector.broadcast %cst_22 : f32 to vector<32x128xf32>
    %67 = arith.subf %66, %63 : vector<32x128xf32>
    %68 = arith.select %65, %67, %63 : vector<32x128xi1>, vector<32x128xf32>
    %69 = arith.truncf %22 : vector<32x128xf32> to vector<32x128xbf16>
    %c0_23 = arith.constant 0 : index
    %c0_24 = arith.constant 0 : index
    %70 = vector.load %arg4[%c0_23, %c0_24] : memref<128x128xbf16, #tpu.memory_space<vmem>>, vector<128x128xbf16>
    %cst_25 = arith.constant dense<0.000000e+00> : vector<32x128xf32>
    %71 = tpu.matmul %69, %70, %cst_25 {dimension_numbers = #tpu.dot_dimension_numbers<[1], [0], [0], [1], [0, 0, 1, 1], [], []>} : vector<32x128xbf16>, vector<128x128xbf16>, vector<32x128xf32> -> vector<32x128xf32>
    %c0_26 = arith.constant 0 : index
    %c0_27 = arith.constant 0 : index
    %72 = vector.load %arg5[%c0_26, %c0_27] : memref<1x128xf32, #tpu.memory_space<vmem>>, vector<1x128xf32>
    %73 = vector.broadcast %72 : vector<1x128xf32> to vector<32x128xf32>
    %74 = arith.addf %71, %73 : vector<32x128xf32>
    %cst_28 = arith.constant 0.000000e+00 : f32
    %75 = vector.broadcast %cst_28 : f32 to vector<32x128xf32>
    %76 = arith.maximumf %74, %75 : vector<32x128xf32>
    %77 = arith.truncf %68 : vector<32x128xf32> to vector<32x128xbf16>
    %c0_29 = arith.constant 0 : index
    %c0_30 = arith.constant 0 : index
    %78 = vector.load %arg6[%c0_29, %c0_30] : memref<128x128xbf16, #tpu.memory_space<vmem>>, vector<128x128xbf16>
    %cst_31 = arith.constant dense<0.000000e+00> : vector<32x128xf32>
    %79 = tpu.matmul %77, %78, %cst_31 {dimension_numbers = #tpu.dot_dimension_numbers<[1], [0], [0], [1], [0, 0, 1, 1], [], []>} : vector<32x128xbf16>, vector<128x128xbf16>, vector<32x128xf32> -> vector<32x128xf32>
    %c0_32 = arith.constant 0 : index
    %c0_33 = arith.constant 0 : index
    %80 = vector.load %arg7[%c0_32, %c0_33] : memref<1x128xf32, #tpu.memory_space<vmem>>, vector<1x128xf32>
    %81 = vector.broadcast %80 : vector<1x128xf32> to vector<32x128xf32>
    %82 = arith.addf %79, %81 : vector<32x128xf32>
    %83 = arith.negf %82 : vector<32x128xf32>
    %84 = math.exp %83 : vector<32x128xf32>
    %cst_34 = arith.constant 1.000000e+00 : f32
    %85 = vector.broadcast %cst_34 : f32 to vector<32x128xf32>
    %86 = arith.addf %85, %84 : vector<32x128xf32>
    %87 = arith.divf %85, %86 : vector<32x128xf32>
    %88 = arith.mulf %87, %87 : vector<32x128xf32>
    %cst_35 = arith.constant 2.48015876E-5 : f32
    %89 = vector.broadcast %cst_35 : f32 to vector<32x128xf32>
    %90 = arith.mulf %88, %89 : vector<32x128xf32>
    %cst_36 = arith.constant -0.00138888892 : f32
    %91 = vector.broadcast %cst_36 : f32 to vector<32x128xf32>
    %92 = arith.addf %91, %90 : vector<32x128xf32>
    %93 = arith.mulf %88, %92 : vector<32x128xf32>
    %cst_37 = arith.constant 0.0416666679 : f32
    %94 = vector.broadcast %cst_37 : f32 to vector<32x128xf32>
    %95 = arith.addf %94, %93 : vector<32x128xf32>
    %96 = arith.mulf %88, %95 : vector<32x128xf32>
    %cst_38 = arith.constant -5.000000e-01 : f32
    %97 = vector.broadcast %cst_38 : f32 to vector<32x128xf32>
    %98 = arith.addf %97, %96 : vector<32x128xf32>
    %99 = arith.mulf %88, %98 : vector<32x128xf32>
    %cst_39 = arith.constant 1.000000e+00 : f32
    %100 = vector.broadcast %cst_39 : f32 to vector<32x128xf32>
    %101 = arith.addf %100, %99 : vector<32x128xf32>
    %102 = arith.mulf %76, %101 : vector<32x128xf32>
    %103 = arith.truncf %102 : vector<32x128xf32> to vector<32x128xbf16>
    %104 = arith.mulf %87, %87 : vector<32x128xf32>
    %cst_40 = arith.constant 2.75573188E-6 : f32
    %105 = vector.broadcast %cst_40 : f32 to vector<32x128xf32>
    %106 = arith.mulf %104, %105 : vector<32x128xf32>
    %cst_41 = arith.constant -1.98412701E-4 : f32
    %107 = vector.broadcast %cst_41 : f32 to vector<32x128xf32>
    %108 = arith.addf %107, %106 : vector<32x128xf32>
    %109 = arith.mulf %104, %108 : vector<32x128xf32>
    %cst_42 = arith.constant 0.00833333377 : f32
    %110 = vector.broadcast %cst_42 : f32 to vector<32x128xf32>
    %111 = arith.addf %110, %109 : vector<32x128xf32>
    %112 = arith.mulf %104, %111 : vector<32x128xf32>
    %cst_43 = arith.constant -0.166666672 : f32
    %113 = vector.broadcast %cst_43 : f32 to vector<32x128xf32>
    %114 = arith.addf %113, %112 : vector<32x128xf32>
    %115 = arith.mulf %104, %114 : vector<32x128xf32>
    %cst_44 = arith.constant 1.000000e+00 : f32
    %116 = vector.broadcast %cst_44 : f32 to vector<32x128xf32>
    %117 = arith.addf %116, %115 : vector<32x128xf32>
    %118 = arith.mulf %87, %117 : vector<32x128xf32>
    %119 = arith.mulf %76, %118 : vector<32x128xf32>
    %120 = arith.truncf %119 : vector<32x128xf32> to vector<32x128xbf16>
    %121 = tpu.concatenate %103, %120 in 1 : vector<32x128xbf16>, vector<32x128xbf16> -> vector<32x256xbf16>
    %cst_45 = arith.constant dense<0.000000e+00> : vector<64x256xf32>
    %122 = tpu.matmul %2, %121, %cst_45 {dimension_numbers = #tpu.dot_dimension_numbers<[1], [0], [0], [1], [0, 0, 1, 1], [], []>} : vector<64x32xbf16>, vector<32x256xbf16>, vector<64x256xf32> -> vector<64x256xf32>
    %123 = vector.extract_strided_slice %122 {offsets = [0, 0], sizes = [32, 128], strides = [1, 1]} : vector<64x256xf32> to vector<32x128xf32>
    %124 = vector.extract_strided_slice %122 {offsets = [32, 128], sizes = [32, 128], strides = [1, 1]} : vector<64x256xf32> to vector<32x128xf32>
    %125 = arith.subf %123, %124 : vector<32x128xf32>
    %126 = vector.extract_strided_slice %122 {offsets = [0, 128], sizes = [32, 128], strides = [1, 1]} : vector<64x256xf32> to vector<32x128xf32>
    %127 = vector.extract_strided_slice %122 {offsets = [32, 0], sizes = [32, 128], strides = [1, 1]} : vector<64x256xf32> to vector<32x128xf32>
    %128 = arith.addf %126, %127 : vector<32x128xf32>
    %cst_46 = arith.constant 0.000000e+00 : f32
    %129 = vector.broadcast %cst_46 : f32 to vector<32x128xf32>
    %130 = arith.subf %129, %128 : vector<32x128xf32>
    %131 = arith.truncf %125 : vector<32x128xf32> to vector<32x128xbf16>
    %132 = arith.truncf %130 : vector<32x128xf32> to vector<32x128xbf16>
    %133 = tpu.concatenate %131, %132 in 1 : vector<32x128xbf16>, vector<32x128xbf16> -> vector<32x256xbf16>
    %cst_47 = arith.constant dense<0.000000e+00> : vector<32x128xf32>
    %134 = tpu.matmul %133, %3, %cst_47 {dimension_numbers = #tpu.dot_dimension_numbers<[1], [1], [0], [0], [0, 0, 1, 0], [], []>} : vector<32x256xbf16>, vector<128x256xbf16>, vector<32x128xf32> -> vector<32x128xf32>
    %135 = arith.addf %134, %1 : vector<32x128xf32>
    %136 = arith.truncf %135 : vector<32x128xf32> to vector<32x128xbf16>
    %c0_48 = arith.constant 0 : index
    %c0_49 = arith.constant 0 : index
    %137 = vector.load %arg8[%c0_48, %c0_49] : memref<128x128xbf16, #tpu.memory_space<vmem>>, vector<128x128xbf16>
    %cst_50 = arith.constant dense<0.000000e+00> : vector<32x128xf32>
    %138 = tpu.matmul %136, %137, %cst_50 {dimension_numbers = #tpu.dot_dimension_numbers<[1], [0], [0], [1], [0, 0, 1, 1], [], []>} : vector<32x128xbf16>, vector<128x128xbf16>, vector<32x128xf32> -> vector<32x128xf32>
    %c0_51 = arith.constant 0 : index
    %c0_52 = arith.constant 0 : index
    %139 = vector.load %arg9[%c0_51, %c0_52] : memref<1x128xf32, #tpu.memory_space<vmem>>, vector<1x128xf32>
    %140 = vector.broadcast %139 : vector<1x128xf32> to vector<32x128xf32>
    %141 = arith.addf %138, %140 : vector<32x128xf32>
    %142 = vector.shape_cast %141 : vector<32x128xf32> to vector<2x16x128xf32>
    %c0_53 = arith.constant 0 : index
    %c0_54 = arith.constant 0 : index
    %c0_55 = arith.constant 0 : index
    %143 = vector.load %arg10[%c0_53, %c0_54, %c0_55] : memref<2x16x128xf32, #tpu.memory_space<vmem>>, vector<2x16x128xf32>
    tpu.vector_store %arg10[%c0_53, %c0_54, %c0_55], %142 {strides = array<i32>} : memref<2x16x128xf32, #tpu.memory_space<vmem>>, vector<2x16x128xf32>,
    return
  }
  func.func @transform_0(%arg0: i32) -> (i32, i32, i32) {
    %c0_i32 = arith.constant 0 : i32
    %c0_i32_0 = arith.constant 0 : i32
    %c0_i32_1 = arith.constant 0 : i32
    return %arg0, %c0_i32, %c0_i32_0 : i32, i32, i32
  }
  func.func @transform_1(%arg0: i32) -> (i32, i32) {
    %c0_i32 = arith.constant 0 : i32
    %c0_i32_0 = arith.constant 0 : i32
    %c0_i32_1 = arith.constant 0 : i32
    return %c0_i32, %c0_i32_0 : i32, i32
  }
  func.func @transform_2(%arg0: i32) -> (i32, i32) {
    %c0_i32 = arith.constant 0 : i32
    %c0_i32_0 = arith.constant 0 : i32
    %c0_i32_1 = arith.constant 0 : i32
    return %c0_i32, %c0_i32_0 : i32, i32
  }
  func.func @transform_3(%arg0: i32) -> (i32, i32) {
    %c0_i32 = arith.constant 0 : i32
    %c0_i32_0 = arith.constant 0 : i32
    %c0_i32_1 = arith.constant 0 : i32
    return %c0_i32, %c0_i32_0 : i32, i32
  }
  func.func @transform_4(%arg0: i32) -> (i32, i32) {
    %c0_i32 = arith.constant 0 : i32
    %c0_i32_0 = arith.constant 0 : i32
    %c0_i32_1 = arith.constant 0 : i32
    return %c0_i32, %c0_i32_0 : i32, i32
  }
  func.func @transform_5(%arg0: i32) -> (i32, i32) {
    %c0_i32 = arith.constant 0 : i32
    %c0_i32_0 = arith.constant 0 : i32
    %c0_i32_1 = arith.constant 0 : i32
    return %c0_i32, %c0_i32_0 : i32, i32
  }
  func.func @transform_6(%arg0: i32) -> (i32, i32) {
    %c0_i32 = arith.constant 0 : i32
    %c0_i32_0 = arith.constant 0 : i32
    %c0_i32_1 = arith.constant 0 : i32
    return %c0_i32, %c0_i32_0 : i32, i32
  }
  func.func @transform_7(%arg0: i32) -> (i32, i32) {
    %c0_i32 = arith.constant 0 : i32
    %c0_i32_0 = arith.constant 0 : i32
    %c0_i32_1 = arith.constant 0 : i32
    return %c0_i32, %c0_i32_0 : i32, i32
  }
  func.func @transform_8(%arg0: i32) -> (i32, i32) {
    %c0_i32 = arith.constant 0 : i32
    %c0_i32_0 = arith.constant 0 : i32
    %c0_i32_1 = arith.constant 0 : i32
    return %c0_i32, %c0_i32_0 : i32, i32
  }
  func.func @transform_9(%arg0: i32) -> (i32, i32, i32) {
    %c0_i32 = arith.constant 0 : i32
    %c0_i32_0 = arith.constant 0 : i32
    %c0_i32_1 = arith.constant 0 : i32
    return %arg0, %c0_i32, %c0_i32_0 : i32, i32, i32
  }
}

</mosaic_0001>

<llo_original>
// kernel: fpsa_forward.1
$region0: #{fpsa_forward.1}
  #allocation0 [shape = 'u32[]', space=smem, size = 0x4, offset = 0x4, fixed_abs, tag = 'smem constant byte address 0x4 - core index']
  #allocation1 [shape = 'u32[144,128]{1,0:T(1,128)}', space=vmem, size = 0x12000, scoped, tag = 'internal scratch']
  %s0 = inlined_call_operand.vmem [shape: f32[4,16,128], index: 0, kind: input, shape index: {}]
  %s1 = inlined_call_operand.vmem [shape: bf16[64,32], index: 1, kind: input, shape index: {}]
  %s2 = inlined_call_operand.vmem [shape: bf16[128,256], index: 2, kind: input, shape index: {}]
  %s3 = inlined_call_operand.vmem [shape: bf16[128,128], index: 3, kind: input, shape index: {}]
  %s4 = inlined_call_operand.vmem [shape: f32[1,128], index: 4, kind: input, shape index: {}]
  %s5 = inlined_call_operand.vmem [shape: bf16[128,128], index: 5, kind: input, shape index: {}]
  %s6 = inlined_call_operand.vmem [shape: f32[1,128], index: 6, kind: input, shape index: {}]
  %s7 = inlined_call_operand.vmem [shape: bf16[128,128], index: 7, kind: input, shape index: {}]
  %s8 = inlined_call_operand.vmem [shape: f32[1,128], index: 8, kind: input, shape index: {}]
  %s9 = inlined_call_operand.vmem [shape: f32[4,16,128], index: 9, kind: output, shape index: {}]
  %s10 = sld [smem:[#allocation0]]
  $region69: #{fpsa_forward.1} parent=0
    _
  %s12 = ssub.s32 1, %s10
  %s13 = scalar_select 0, %s12, %s10
  loop: start=0, step=1, limit=4
  $region2: #{fpsa_forward.1} parent=0 // loop_pre_header
    _
  $region3: #{fpsa_forward.1} parent=0 // loop_header
    %s15 = sphi 0, %s19
    %p16 = scmp.ge.s32.totalorder %s15, 4
    %s25 = sphi 0, %s27
    %s28 = sphi 0, %s25
    %s29 = sphi 0, %s28
    %s45 = sphi 0, %s29
    %s49 = sphi 0, %s49
    %s51 = sphi 0, %s49
    %s52 = sphi 0, %s51
    %s66 = sphi 0, %s52
    %s70 = sphi 0, %s70
    %s72 = sphi 0, %s70
    %s73 = sphi 0, %s72
    %s87 = sphi 0, %s73
    %s91 = sphi 0, %s91
    %s93 = sphi 0, %s91
    %s94 = sphi 0, %s93
    %s108 = sphi 0, %s94
    %s112 = sphi 0, %s112
    %s114 = sphi 0, %s112
    %s115 = sphi 0, %s114
    %s129 = sphi 0, %s115
    %s133 = sphi 0, %s133
    %s135 = sphi 0, %s133
    %s136 = sphi 0, %s135
    %s150 = sphi 0, %s136
    %s154 = sphi 0, %s154
    %s156 = sphi 0, %s154
    %s157 = sphi 0, %s156
    %s171 = sphi 0, %s157
    %s175 = sphi 0, %s175
    %s177 = sphi 0, %s175
    %s178 = sphi 0, %s177
    %s192 = sphi 0, %s178
    %s196 = sphi 0, %s196
    %s198 = sphi 0, %s196
    %s199 = sphi 0, %s198
    %s213 = sphi 0, %s199
    %s219 = sphi 0, %s221
    %s222 = sphi 0, %s219
    %s223 = sphi 0, %s222
    %s239 = sphi 0, %s223
  $region4: #{fpsa_forward.1} parent=0 // loop_header_branch
    %18 = sbr.rel (%p16) target = $region8
  $region5: #{fpsa_forward.1} parent=0 // loop_body
    %s20 = ssub.s32 %s15, 1
    %s21 = ssub.s32 %s15, 2
    %s22 = sadd.s32 %s15, 1
    %s23 = ssub.s32 %s15, %s22
    %p24 = scmp.eq.s32.totalorder %s23, 0
    %s26 = sadd.s32 %s25, 1
    %s27 = scalar_select %p24, %s25, %s26
    %p30 = pneg %p24
    %p31 = scmp.eq.s32.totalorder %s15, 1
    %p32 = por %p30, %p31
    %p33 = scmp.ne.s32.totalorder %s25, %s28
    %p34 = scmp.eq.s32.totalorder %s15, 0
    %p35 = por %p33, %p34
    %p36 = scmp.ne.s32.totalorder %s25, %s28
    %p37 = scmp.eq.s32.totalorder %s20, 1
    %p38 = por %p36, %p37
    %p39 = scmp.ne.s32.totalorder %s28, %s29
    %p40 = scmp.eq.s32.totalorder %s20, 0
    %p41 = por %p39, %p40
    %p42 = scmp.ne.s32.totalorder %s28, %s29
    %p43 = scmp.eq.s32.totalorder %s21, 1
    %p44 = por %p42, %p43
    %p46 = scmp.ne.s32.totalorder %s29, %s45
    %p47 = scmp.eq.s32.totalorder %s21, 0
    %p48 = por %p46, %p47
    %s50 = sadd.s32 %s49, 1
    %p53 = scmp.eq.s32.totalorder %s15, 1
    %p54 = scmp.ne.s32.totalorder %s49, %s51
    %p55 = scmp.eq.s32.totalorder %s15, 0
    %p56 = por %p54, %p55
    %p57 = scmp.ne.s32.totalorder %s49, %s51
    %p58 = scmp.eq.s32.totalorder %s20, 1
    %p59 = por %p57, %p58
    %p60 = scmp.ne.s32.totalorder %s51, %s52
    %p61 = scmp.eq.s32.totalorder %s20, 0
    %p62 = por %p60, %p61
    %p63 = scmp.ne.s32.totalorder %s51, %s52
    %p64 = scmp.eq.s32.totalorder %s21, 1
    %p65 = por %p63, %p64
    %p67 = scmp.ne.s32.totalorder %s52, %s66
    %p68 = scmp.eq.s32.totalorder %s21, 0
    %p69 = por %p67, %p68
    %s71 = sadd.s32 %s70, 1
    %p74 = scmp.eq.s32.totalorder %s15, 1
    %p75 = scmp.ne.s32.totalorder %s70, %s72
    %p76 = scmp.eq.s32.totalorder %s15, 0
    %p77 = por %p75, %p76
    %p78 = scmp.ne.s32.totalorder %s70, %s72
    %p79 = scmp.eq.s32.totalorder %s20, 1
    %p80 = por %p78, %p79
    %p81 = scmp.ne.s32.totalorder %s72, %s73
    %p82 = scmp.eq.s32.totalorder %s20, 0
    %p83 = por %p81, %p82
    %p84 = scmp.ne.s32.totalorder %s72, %s73
    %p85 = scmp.eq.s32.totalorder %s21, 1
    %p86 = por %p84, %p85
    %p88 = scmp.ne.s32.totalorder %s73, %s87
    %p89 = scmp.eq.s32.totalorder %s21, 0
    %p90 = por %p88, %p89
    %s92 = sadd.s32 %s91, 1
    %p95 = scmp.eq.s32.totalorder %s15, 1
    %p96 = scmp.ne.s32.totalorder %s91, %s93
    %p97 = scmp.eq.s32.totalorder %s15, 0
    %p98 = por %p96, %p97
    %p99 = scmp.ne.s32.totalorder %s91, %s93
    %p100 = scmp.eq.s32.totalorder %s20, 1
    %p101 = por %p99, %p100
    %p102 = scmp.ne.s32.totalorder %s93, %s94
    %p103 = scmp.eq.s32.totalorder %s20, 0
    %p104 = por %p102, %p103
    %p105 = scmp.ne.s32.totalorder %s93, %s94
    %p106 = scmp.eq.s32.totalorder %s21, 1
    %p107 = por %p105, %p106
    %p109 = scmp.ne.s32.totalorder %s94, %s108
    %p110 = scmp.eq.s32.totalorder %s21, 0
    %p111 = por %p109, %p110
    %s113 = sadd.s32 %s112, 1
    %p116 = scmp.eq.s32.totalorder %s15, 1
    %p117 = scmp.ne.s32.totalorder %s112, %s114
    %p118 = scmp.eq.s32.totalorder %s15, 0
    %p119 = por %p117, %p118
    %p120 = scmp.ne.s32.totalorder %s112, %s114
    %p121 = scmp.eq.s32.totalorder %s20, 1
    %p122 = por %p120, %p121
    %p123 = scmp.ne.s32.totalorder %s114, %s115
    %p124 = scmp.eq.s32.totalorder %s20, 0
    %p125 = por %p123, %p124
    %p126 = scmp.ne.s32.totalorder %s114, %s115
    %p127 = scmp.eq.s32.totalorder %s21, 1
    %p128 = por %p126, %p127
    %p130 = scmp.ne.s32.totalorder %s115, %s129
    %p131 = scmp.eq.s32.totalorder %s21, 0
    %p132 = por %p130, %p131
    %s134 = sadd.s32 %s133, 1
    %p137 = scmp.eq.s32.totalorder %s15, 1
    %p138 = scmp.ne.s32.totalorder %s133, %s135
    %p139 = scmp.eq.s32.totalorder %s15, 0
    %p140 = por %p138, %p139
    %p141 = scmp.ne.s32.totalorder %s133, %s135
    %p142 = scmp.eq.s32.totalorder %s20, 1
    %p143 = por %p141, %p142
    %p144 = scmp.ne.s32.totalorder %s135, %s136
    %p145 = scmp.eq.s32.totalorder %s20, 0
    %p146 = por %p144, %p145
    %p147 = scmp.ne.s32.totalorder %s135, %s136
    %p148 = scmp.eq.s32.totalorder %s21, 1
    %p149 = por %p147, %p148
    %p151 = scmp.ne.s32.totalorder %s136, %s150
    %p152 = scmp.eq.s32.totalorder %s21, 0
    %p153 = por %p151, %p152
    %s155 = sadd.s32 %s154, 1
    %p158 = scmp.eq.s32.totalorder %s15, 1
    %p159 = scmp.ne.s32.totalorder %s154, %s156
    %p160 = scmp.eq.s32.totalorder %s15, 0
    %p161 = por %p159, %p160
    %p162 = scmp.ne.s32.totalorder %s154, %s156
    %p163 = scmp.eq.s32.totalorder %s20, 1
    %p164 = por %p162, %p163
    %p165 = scmp.ne.s32.totalorder %s156, %s157
    %p166 = scmp.eq.s32.totalorder %s20, 0
    %p167 = por %p165, %p166
    %p168 = scmp.ne.s32.totalorder %s156, %s157
    %p169 = scmp.eq.s32.totalorder %s21, 1
    %p170 = por %p168, %p169
    %p172 = scmp.ne.s32.totalorder %s157, %s171
    %p173 = scmp.eq.s32.totalorder %s21, 0
    %p174 = por %p172, %p173
    %s176 = sadd.s32 %s175, 1
    %p179 = scmp.eq.s32.totalorder %s15, 1
    %p180 = scmp.ne.s32.totalorder %s175, %s177
    %p181 = scmp.eq.s32.totalorder %s15, 0
    %p182 = por %p180, %p181
    %p183 = scmp.ne.s32.totalorder %s175, %s177
    %p184 = scmp.eq.s32.totalorder %s20, 1
    %p185 = por %p183, %p184
    %p186 = scmp.ne.s32.totalorder %s177, %s178
    %p187 = scmp.eq.s32.totalorder %s20, 0
    %p188 = por %p186, %p187
    %p189 = scmp.ne.s32.totalorder %s177, %s178
    %p190 = scmp.eq.s32.totalorder %s21, 1
    %p191 = por %p189, %p190
    %p193 = scmp.ne.s32.totalorder %s178, %s192
    %p194 = scmp.eq.s32.totalorder %s21, 0
    %p195 = por %p193, %p194
    %s197 = sadd.s32 %s196, 1
    %p200 = scmp.eq.s32.totalorder %s15, 1
    %p201 = scmp.ne.s32.totalorder %s196, %s198
    %p202 = scmp.eq.s32.totalorder %s15, 0
    %p203 = por %p201, %p202
    %p204 = scmp.ne.s32.totalorder %s196, %s198
    %p205 = scmp.eq.s32.totalorder %s20, 1
    %p206 = por %p204, %p205
    %p207 = scmp.ne.s32.totalorder %s198, %s199
    %p208 = scmp.eq.s32.totalorder %s20, 0
    %p209 = por %p207, %p208
    %p210 = scmp.ne.s32.totalorder %s198, %s199
    %p211 = scmp.eq.s32.totalorder %s21, 1
    %p212 = por %p210, %p211
    %p214 = scmp.ne.s32.totalorder %s199, %s213
    %p215 = scmp.eq.s32.totalorder %s21, 0
    %p216 = por %p214, %p215
    %s217 = ssub.s32 %s15, %s22
    %p218 = scmp.eq.s32.totalorder %s217, 0
    %s220 = sadd.s32 %s219, 1
    %s221 = scalar_select %p218, %s219, %s220
    %p224 = pneg %p218
    %p225 = scmp.eq.s32.totalorder %s15, 1
    %p226 = por %p224, %p225
    %p227 = scmp.ne.s32.totalorder %s219, %s222
    %p228 = scmp.eq.s32.totalorder %s15, 0
    %p229 = por %p227, %p228
    %p230 = scmp.ne.s32.totalorder %s219, %s222
    %p231 = scmp.eq.s32.totalorder %s20, 1
    %p232 = por %p230, %p231
    %p233 = scmp.ne.s32.totalorder %s222, %s223
    %p234 = scmp.eq.s32.totalorder %s20, 0
    %p235 = por %p233, %p234
    %p236 = scmp.ne.s32.totalorder %s222, %s223
    %p237 = scmp.eq.s32.totalorder %s21, 1
    %p238 = por %p236, %p237
    %p240 = scmp.ne.s32.totalorder %s223, %s239
    %p241 = scmp.eq.s32.totalorder %s21, 0
    %p242 = por %p240, %p241
    %p243 = scmp.le.s32.totalorder 1, %s15
    %p244 = scmp.lt.s32.totalorder %s15, 3
    %p245 = pnand %p243, %p244
    %p246 = pneg %p245
    // Predicated region
    $region9: #{fpsa_forward.1} parent=5 // pred_check
      _
    $region10: #{fpsa_forward.1} parent=5 // pred_check_branch
      %248 = sbr.rel (%p245) target = $region12
    $region11: #{fpsa_forward.1} parent=5 // pred_region
      %s249 = ssub.s32 %s15, 1
      // Predicated region
      $region13: #{fpsa_forward.1} parent=11 // pred_check
        %p250 = pneg %p62
      $region14: #{fpsa_forward.1} parent=11 // pred_check_branch
        %252 = sbr.rel (%p250) target = $region16
      $region15: #{fpsa_forward.1} parent=11 // pred_region
        _
      $region16: #{fpsa_forward.1} parent=11 // pred_fallthru
        _
      // Predicated region
      $region17: #{fpsa_forward.1} parent=11 // pred_check
        %p253 = pneg %p83
      $region18: #{fpsa_forward.1} parent=11 // pred_check_branch
        %255 = sbr.rel (%p253) target = $region20
      $region19: #{fpsa_forward.1} parent=11 // pred_region
        _
      $region20: #{fpsa_forward.1} parent=11 // pred_fallthru
        _
      // Predicated region
      $region21: #{fpsa_forward.1} parent=11 // pred_check
        %p256 = pneg %p104
      $region22: #{fpsa_forward.1} parent=11 // pred_check_branch
        %258 = sbr.rel (%p256) target = $region24
      $region23: #{fpsa_forward.1} parent=11 // pred_region
        _
      $region24: #{fpsa_forward.1} parent=11 // pred_fallthru
        _
      // Predicated region
      $region25: #{fpsa_forward.1} parent=11 // pred_check
        %p259 = pneg %p125
      $region26: #{fpsa_forward.1} parent=11 // pred_check_branch
        %261 = sbr.rel (%p259) target = $region28
      $region27: #{fpsa_forward.1} parent=11 // pred_region
        _
      $region28: #{fpsa_forward.1} parent=11 // pred_fallthru
        _
      // Predicated region
      $region29: #{fpsa_forward.1} parent=11 // pred_check
        %p262 = pneg %p146
      $region30: #{fpsa_forward.1} parent=11 // pred_check_branch
        %264 = sbr.rel (%p262) target = $region32
      $region31: #{fpsa_forward.1} parent=11 // pred_region
        _
      $region32: #{fpsa_forward.1} parent=11 // pred_fallthru
        _
      // Predicated region
      $region33: #{fpsa_forward.1} parent=11 // pred_check
        %p265 = pneg %p167
      $region34: #{fpsa_forward.1} parent=11 // pred_check_branch
        %267 = sbr.rel (%p265) target = $region36
      $region35: #{fpsa_forward.1} parent=11 // pred_region
        _
      $region36: #{fpsa_forward.1} parent=11 // pred_fallthru
        _
      // Predicated region
      $region37: #{fpsa_forward.1} parent=11 // pred_check
        %p268 = pneg %p188
      $region38: #{fpsa_forward.1} parent=11 // pred_check_branch
        %270 = sbr.rel (%p268) target = $region40
      $region39: #{fpsa_forward.1} parent=11 // pred_region
        _
      $region40: #{fpsa_forward.1} parent=11 // pred_fallthru
        _
      // Predicated region
      $region41: #{fpsa_forward.1} parent=11 // pred_check
        %p271 = pneg %p209
      $region42: #{fpsa_forward.1} parent=11 // pred_check_branch
        %273 = sbr.rel (%p271) target = $region44
      $region43: #{fpsa_forward.1} parent=11 // pred_region
        _
      $region44: #{fpsa_forward.1} parent=11 // pred_fallthru
        _
    $region12: #{fpsa_forward.1} parent=5 // pred_fallthru
      _
    %p274 = scmp.lt.s32.totalorder %s15, 2
    // Predicated region
    $region45: #{fpsa_forward.1} parent=5 // pred_check
      %p275 = pneg %p274
    $region46: #{fpsa_forward.1} parent=5 // pred_check_branch
      %277 = sbr.rel (%p275) target = $region48
    $region47: #{fpsa_forward.1} parent=5 // pred_region
      // Predicated region
      $region49: #{fpsa_forward.1} parent=47 // pred_check
        %p278 = pneg %p35
      $region50: #{fpsa_forward.1} parent=47 // pred_check_branch
        %280 = sbr.rel (%p278) target = $region52
      $region51: #{fpsa_forward.1} parent=47 // pred_region
        %s281 = smul.u32 2, %s15
        %p282 = scmp.lt.s32.totalorder %s281, 3
        %s283 = scalar_select %p282, %s281, 3
        %s284 = smul.addr %s283, 2
        %s285 = smul.addr %s284, 8
        %s286 = scalar_lea.vmem %s0, %s285
        %s287 = smul.u32 2, %s15
      $region52: #{fpsa_forward.1} parent=47 // pred_fallthru
        _
    $region48: #{fpsa_forward.1} parent=5 // pred_fallthru
      _
    %p288 = scmp.le.s32.totalorder 1, %s15
    %p289 = scmp.lt.s32.totalorder %s15, 3
    %p290 = pnand %p288, %p289
    %p291 = pneg %p290
    // Predicated region
    $region53: #{fpsa_forward.1} parent=5 // pred_check
      _
    $region54: #{fpsa_forward.1} parent=5 // pred_check_branch
      %293 = sbr.rel (%p290) target = $region56
    $region55: #{fpsa_forward.1} parent=5 // pred_region
      %s294 = ssub.s32 %s15, 1
      %s295 = smul.u32 2, %s20
      %p296 = scmp.lt.s32.totalorder %s295, 3
      %s297 = scalar_select %p296, %s295, 3
      %s298 = smul.addr %s297, 2
      %s299 = smul.addr %s298, 8
      %s300 = scalar_lea.vmem %s0, %s299
      %p301 = pneg %p41
      %p302 = pneg %p38
      %p303 = pneg %p62
      %p304 = pneg %p59
      %p305 = pneg %p83
      %p306 = pneg %p80
      %p307 = pneg %p104
      %p308 = pneg %p101
      %p309 = pneg %p125
      %p310 = pneg %p122
      %p311 = pneg %p146
      %p312 = pneg %p143
      %p313 = pneg %p167
      %p314 = pneg %p164
      %p315 = pneg %p188
      %p316 = pneg %p185
      %p317 = pneg %p209
      %p318 = pneg %p206
      %p319 = pneg %p235
      %p320 = pneg %p232
      %s321 = smul.u32 2, %s20
      %p322 = scmp.lt.s32.totalorder %s321, 3
      %s323 = scalar_select %p322, %s321, 3
      %s324 = smul.addr %s323, 2
      %s325 = smul.addr %s324, 8
      %s326 = scalar_lea.vmem %s9, %s325
      %s327 = smul.u32 2, %s20
      %p328 = scmp.lt.s32.totalorder %s327, 3
      %s329 = scalar_select %p328, %s327, 3
      %s330 = smul.addr %s329, 2
      %s331 = smul.addr %s330, 8
      %s332 = scalar_lea.vmem %s0, %s331
      %s333 = smul.u32 2, %s20
      %s334 = smul.u32 2, %s20
      %p335 = scmp.lt.s32.totalorder %s334, 3
      %s336 = scalar_select %p335, %s334, 3
      %s337 = smul.addr %s336, 2
      %s338 = smul.addr %s337, 8
      %s339 = scalar_lea.vmem %s9, %s338
      %s340 = smul.u32 2, %s20
      %v342 = vld [vmem:[%s332] sm:$0xff]
      %v343 = vld [vmem:[%s332 + $0x8] sm:$0xff]
      %v344 = vld [vmem:[%s332 + $0x10] sm:$0xff]
      %v345 = vld [vmem:[%s332 + $0x18] sm:$0xff]
      %v346 = vld [vmem:[%s1] sm:$0xf]
      %v347 = vld [vmem:[%s1 + $0x4] sm:$0xf]
      %v348 = vld [vmem:[%s1 + $0x8] sm:$0xf]
      %v349 = vld [vmem:[%s1 + $0xc] sm:$0xf]
      %v350 = vld [vmem:[%s1 + $0x10] sm:$0xf]
      %v351 = vld [vmem:[%s1 + $0x14] sm:$0xf]
      %v352 = vld [vmem:[%s1 + $0x18] sm:$0xf]
      %v353 = vld [vmem:[%s1 + $0x1c] sm:$0xf]
      %v354 = vld [vmem:[%s2] sm:$0xff]
      %v355 = vld [vmem:[%s2 + $0x8] sm:$0xff]
      %v356 = vld [vmem:[%s2 + $0x10] sm:$0xff]
      %v357 = vld [vmem:[%s2 + $0x18] sm:$0xff]
      %v358 = vld [vmem:[%s2 + $0x20] sm:$0xff]
      %v359 = vld [vmem:[%s2 + $0x28] sm:$0xff]
      %v360 = vld [vmem:[%s2 + $0x30] sm:$0xff]
      %v361 = vld [vmem:[%s2 + $0x38] sm:$0xff]
      %v362 = vld [vmem:[%s2 + $0x40] sm:$0xff]
      %v363 = vld [vmem:[%s2 + $0x48] sm:$0xff]
      %v364 = vld [vmem:[%s2 + $0x50] sm:$0xff]
      %v365 = vld [vmem:[%s2 + $0x58] sm:$0xff]
      %v366 = vld [vmem:[%s2 + $0x60] sm:$0xff]
      %v367 = vld [vmem:[%s2 + $0x68] sm:$0xff]
      %v368 = vld [vmem:[%s2 + $0x70] sm:$0xff]
      %v369 = vld [vmem:[%s2 + $0x78] sm:$0xff]
      %v370 = vpack.c.bf16 %v343, %v342
      %v371 = vpack.c.bf16 %v345, %v344
      %v380 = vunpack.c.l.b16 %v346
      %v381 = vunpack.c.l.b16 %v347
      %v382 = vunpack.c.l.b16 %v348
      %v383 = vunpack.c.l.b16 %v349
      %v384 = vunpack.c.l.b16 %v350
      %v385 = vunpack.c.l.b16 %v351
      %v386 = vunpack.c.l.b16 %v352
      %v387 = vunpack.c.l.b16 %v353
      %v388 = vpack.c.b16 %v381, %v380
      %v389 = vpack.c.b16 %v383, %v382
      %v390 = vpack.c.b16 %v385, %v384
      %v391 = vpack.c.b16 %v387, %v386
      %vm392 = vcmask 261120
      %v394 = vsel %vm392, %v388, 0
      %v397 = vsel %vm392, %v389, 0
      %v400 = vsel %vm392, %v390, 0
      %v403 = vsel %vm392, %v391, 0
      %405 = vmatprep.subr.bf16.mxu0 0
      %406 = vmatpush1.bf16.msra.mxu0 %v370
      %407 = vmatprep.subr.bf16.mxu0 0
      %408 = vmatpush1.bf16.msra.mxu0 %v371
      %409 = vmatprep.subr.bf16.mxu0 0
      %410 = vmatpush1.bf16.msra.mxu0 0
      %411 = vmatprep.subr.bf16.mxu0 0
      %412 = vmatpush1.bf16.msra.mxu0 0
      %413 = vmatprep.subr.bf16.mxu0 0
      %414 = vmatpush1.bf16.msra.mxu0 0
      %415 = vmatprep.subr.bf16.mxu0 0
      %416 = vmatpush1.bf16.msra.mxu0 0
      %417 = vmatprep.subr.bf16.mxu0 0
      %418 = vmatpush1.bf16.msra.mxu0 0
      %419 = vmatprep.subr.bf16.mxu0 0
      %420 = vmatpush1.bf16.msra.mxu0 0
      %421 = vmatprep.subr.bf16.mxu0 0
      %422 = vmatpush1.bf16.msra.mxu0 0
      %423 = vmatprep.subr.bf16.mxu0 0
      %424 = vmatpush1.bf16.msra.mxu0 0
      %425 = vmatprep.subr.bf16.mxu0 0
      %426 = vmatpush1.bf16.msra.mxu0 0
      %427 = vmatprep.subr.bf16.mxu0 0
      %428 = vmatpush1.bf16.msra.mxu0 0
      %429 = vmatprep.subr.bf16.mxu0 0
      %430 = vmatpush1.bf16.msra.mxu0 0
      %431 = vmatprep.subr.bf16.mxu0 0
      %432 = vmatpush1.bf16.msra.mxu0 0
      %433 = vmatprep.subr.bf16.mxu0 0
      %434 = vmatpush1.bf16.msra.mxu0 0
      %435 = vmatprep.subr.bf16.mxu0 0
      %436 = vmatpush1.bf16.msra.mxu0 0
      %437 = vmatprep.mubr.bf16.mxu0 0
      %438 = vmatmul.mubr.bf16.gmra.mrb[0].mxu0 %v394
      %v439 = vpop.f32.mrb[0].mxu0
      %v440 = vadd.f32 0.0, %v439
      %v441 = vpop.f32.mrb[0].mxu0
      %v442 = vpop.f32.mrb[0].mxu0
      %v443 = vadd.f32 0.0, %v442
      %v444 = vpop.f32.mrb[0].mxu0
      %445 = vmatprep.mubr.bf16.mxu0 0
      %446 = vmatmul.mubr.bf16.gmra.mrb[0].mxu0 %v397
      %v447 = vpop.f32.mrb[0].mxu0
      %v448 = vadd.f32 0.0, %v447
      %v449 = vpop.f32.mrb[0].mxu0
      %v450 = vpop.f32.mrb[0].mxu0
      %v451 = vadd.f32 0.0, %v450
      %v452 = vpop.f32.mrb[0].mxu0
      %453 = vmatprep.mubr.bf16.mxu0 0
      %454 = vmatmul.mubr.bf16.gmra.mrb[0].mxu0 %v400
      %v455 = vpop.f32.mrb[0].mxu0
      %v456 = vadd.f32 0.0, %v455
      %v457 = vpop.f32.mrb[0].mxu0
      %v458 = vpop.f32.mrb[0].mxu0
      %v459 = vadd.f32 0.0, %v458
      %v460 = vpop.f32.mrb[0].mxu0
      %461 = vmatprep.mubr.bf16.mxu0 0
      %462 = vmatmul.mubr.bf16.gmra.mrb[0].mxu0 %v403
      %v463 = vpop.f32.mrb[0].mxu0
      %v464 = vadd.f32 0.0, %v463
      %v465 = vpop.f32.mrb[0].mxu0
      %v466 = vpop.f32.mrb[0].mxu0
      %v467 = vadd.f32 0.0, %v466
      %v468 = vpop.f32.mrb[0].mxu0
      %469 = vdwg.mxu0
      %v470 = vpack.c.bf16 %v443, %v440
      %v471 = vpack.c.bf16 %v451, %v448
      %v472 = vpack.c.bf16 %v459, %v456
      %v473 = vpack.c.bf16 %v467, %v464
      %v490 = vunpack.c.l.b16 %v354
      %v491 = vunpack.c.h.b16 %v354
      %v492 = vunpack.c.l.b16 %v355
      %v493 = vunpack.c.h.b16 %v355
      %v494 = vunpack.c.l.b16 %v356
      %v495 = vunpack.c.h.b16 %v356
      %v496 = vunpack.c.l.b16 %v357
      %v497 = vunpack.c.h.b16 %v357
      %v498 = vunpack.c.l.b16 %v358
      %v499 = vunpack.c.h.b16 %v358
      %v500 = vunpack.c.l.b16 %v359
      %v501 = vunpack.c.h.b16 %v359
      %v502 = vunpack.c.l.b16 %v360
      %v503 = vunpack.c.h.b16 %v360
      %v504 = vunpack.c.l.b16 %v361
      %v505 = vunpack.c.h.b16 %v361
      %v506 = vunpack.c.l.b16 %v362
      %v507 = vunpack.c.h.b16 %v362
      %v508 = vunpack.c.l.b16 %v363
      %v509 = vunpack.c.h.b16 %v363
      %v510 = vunpack.c.l.b16 %v364
      %v511 = vunpack.c.h.b16 %v364
      %v512 = vunpack.c.l.b16 %v365
      %v513 = vunpack.c.h.b16 %v365
      %v514 = vunpack.c.l.b16 %v366
      %v515 = vunpack.c.h.b16 %v366
      %v516 = vunpack.c.l.b16 %v367
      %v517 = vunpack.c.h.b16 %v367
      %v518 = vunpack.c.l.b16 %v368
      %v519 = vunpack.c.h.b16 %v368
      %v520 = vunpack.c.l.b16 %v369
      %v521 = vunpack.c.h.b16 %v369
      %v522 = vpack.c.b16 %v492, %v490
      %v523 = vpack.c.b16 %v493, %v491
      %v524 = vpack.c.b16 %v496, %v494
      %v525 = vpack.c.b16 %v497, %v495
      %v526 = vpack.c.b16 %v500, %v498
      %v527 = vpack.c.b16 %v501, %v499
      %v528 = vpack.c.b16 %v504, %v502
      %v529 = vpack.c.b16 %v505, %v503
      %v530 = vpack.c.b16 %v508, %v506
      %v531 = vpack.c.b16 %v509, %v507
      %v532 = vpack.c.b16 %v512, %v510
      %v533 = vpack.c.b16 %v513, %v511
      %v534 = vpack.c.b16 %v516, %v514
      %v535 = vpack.c.b16 %v517, %v515
      %v536 = vpack.c.b16 %v520, %v518
      %v537 = vpack.c.b16 %v521, %v519
      %554 = vmatprep.subr.bf16.mxu0 %v523
      %555 = vmatpush1.bf16.msra.mxu0 %v522
      %556 = vmatprep.subr.bf16.mxu0 %v525
      %557 = vmatpush1.bf16.msra.mxu0 %v524
      %558 = vmatprep.subr.bf16.mxu0 %v527
      %559 = vmatpush1.bf16.msra.mxu0 %v526
      %560 = vmatprep.subr.bf16.mxu0 %v529
      %561 = vmatpush1.bf16.msra.mxu0 %v528
      %562 = vmatprep.subr.bf16.mxu0 %v531
      %563 = vmatpush1.bf16.msra.mxu0 %v530
      %564 = vmatprep.subr.bf16.mxu0 %v533
      %565 = vmatpush1.bf16.msra.mxu0 %v532
      %566 = vmatprep.subr.bf16.mxu0 %v535
      %567 = vmatpush1.bf16.msra.mxu0 %v534
      %568 = vmatprep.subr.bf16.mxu0 %v537
      %569 = vmatpush1.bf16.msra.mxu0 %v536
      %570 = vmatprep.subr.bf16.mxu0 0
      %571 = vmatpush1.bf16.msra.mxu0 0
      %572 = vmatprep.subr.bf16.mxu0 0
      %573 = vmatpush1.bf16.msra.mxu0 0
      %574 = vmatprep.subr.bf16.mxu0 0
      %575 = vmatpush1.bf16.msra.mxu0 0
      %576 = vmatprep.subr.bf16.mxu0 0
      %577 = vmatpush1.bf16.msra.mxu0 0
      %578 = vmatprep.subr.bf16.mxu0 0
      %579 = vmatpush1.bf16.msra.mxu0 0
      %580 = vmatprep.subr.bf16.mxu0 0
      %581 = vmatpush1.bf16.msra.mxu0 0
      %582 = vmatprep.subr.bf16.mxu0 0
      %583 = vmatpush1.bf16.msra.mxu0 0
      %584 = vmatprep.subr.bf16.mxu0 0
      %585 = vmatpush1.bf16.msra.mxu0 0
      %586 = vmatprep.mubr.bf16.mxu0 0
      %587 = vmatmul.mubr.bf16.gmra.mrb[0].mxu0 %v470
      %v588 = vpop.f32.mrb[0].mxu0
      %v589 = vadd.f32 0.0, %v588
      %v590 = vpop.f32.mrb[0].mxu0
      %v591 = vadd.f32 0.0, %v590
      %v592 = vpop.f32.mrb[0].mxu0
      %v593 = vadd.f32 0.0, %v592
      %v594 = vpop.f32.mrb[0].mxu0
      %v595 = vadd.f32 0.0, %v594
      %596 = vmatprep.mubr.bf16.mxu0 0
      %597 = vmatmul.mubr.bf16.gmra.mrb[0].mxu0 %v471
      %v598 = vpop.f32.mrb[0].mxu0
      %v599 = vadd.f32 0.0, %v598
      %v600 = vpop.f32.mrb[0].mxu0
      %v601 = vadd.f32 0.0, %v600
      %v602 = vpop.f32.mrb[0].mxu0
      %v603 = vadd.f32 0.0, %v602
      %v604 = vpop.f32.mrb[0].mxu0
      %v605 = vadd.f32 0.0, %v604
      %606 = vmatprep.mubr.bf16.mxu0 0
      %607 = vmatmul.mubr.bf16.gmra.mrb[0].mxu0 %v472
      %v608 = vpop.f32.mrb[0].mxu0
      %v609 = vadd.f32 0.0, %v608
      %v610 = vpop.f32.mrb[0].mxu0
      %v611 = vadd.f32 0.0, %v610
      %v612 = vpop.f32.mrb[0].mxu0
      %v613 = vadd.f32 0.0, %v612
      %v614 = vpop.f32.mrb[0].mxu0
      %v615 = vadd.f32 0.0, %v614
      %616 = vmatprep.mubr.bf16.mxu0 0
      %617 = vmatmul.mubr.bf16.gmra.mrb[0].mxu0 %v473
      %v618 = vpop.f32.mrb[0].mxu0
      %v619 = vadd.f32 0.0, %v618
      %v620 = vpop.f32.mrb[0].mxu0
      %v621 = vadd.f32 0.0, %v620
      %v622 = vpop.f32.mrb[0].mxu0
      %v623 = vadd.f32 0.0, %v622
      %v624 = vpop.f32.mrb[0].mxu0
      %v625 = vadd.f32 0.0, %v624
      %626 = vdwg.mxu0
      %v627 = vsub.f32 %v589, %v611
      %v628 = vsub.f32 %v593, %v615
      %v629 = vsub.f32 %v599, %v621
      %v630 = vsub.f32 %v603, %v625
      %v631 = vadd.f32 %v591, %v609
      %v632 = vadd.f32 %v595, %v613
      %v633 = vadd.f32 %v601, %v619
      %v634 = vadd.f32 %v605, %v623
      %v635 = vsub.f32 0.0, %v631
      %v636 = vsub.f32 0.0, %v632
      %v637 = vsub.f32 0.0, %v633
      %v638 = vsub.f32 0.0, %v634
      %v639 = vmul.f32 %v627, %v627
      %v640 = vmul.f32 %v628, %v628
      %v641 = vmul.f32 %v629, %v629
      %v642 = vmul.f32 %v630, %v630
      %v643 = vmul.f32 %v635, %v635
      %v644 = vmul.f32 %v636, %v636
      %v645 = vmul.f32 %v637, %v637
      %v646 = vmul.f32 %v638, %v638
      %v647 = vadd.f32 %v639, %v643
      %v648 = vadd.f32 %v640, %v644
      %v649 = vadd.f32 %v641, %v645
      %v650 = vadd.f32 %v642, %v646
      %v651 = vrsqrt.pop %v647
      %v652 = vmul.f32 %v647, %v651
      %vm653 = vcmp.eq.f32.partialorder %v647, inf
      %v654 = vsel %vm653, %v647, %v652
      %vm655 = vcmp.eq.f32.partialorder %v647, 0.0
      %v656 = vand.u32 %v647, 2147483648
      %v657 = vsel %vm655, %v656, %v654
      %v658 = vrsqrt.pop %v648
      %v659 = vmul.f32 %v648, %v658
      %vm660 = vcmp.eq.f32.partialorder %v648, inf
      %v661 = vsel %vm660, %v648, %v659
      %vm662 = vcmp.eq.f32.partialorder %v648, 0.0
      %v663 = vand.u32 %v648, 2147483648
      %v664 = vsel %vm662, %v663, %v661
      %v665 = vrsqrt.pop %v649
      %v666 = vmul.f32 %v649, %v665
      %vm667 = vcmp.eq.f32.partialorder %v649, inf
      %v668 = vsel %vm667, %v649, %v666
      %vm669 = vcmp.eq.f32.partialorder %v649, 0.0
      %v670 = vand.u32 %v649, 2147483648
      %v671 = vsel %vm669, %v670, %v668
      %v672 = vrsqrt.pop %v650
      %v673 = vmul.f32 %v650, %v672
      %vm674 = vcmp.eq.f32.partialorder %v650, inf
      %v675 = vsel %vm674, %v650, %v673
      %vm676 = vcmp.eq.f32.partialorder %v650, 0.0
      %v677 = vand.u32 %v650, 2147483648
      %v678 = vsel %vm676, %v677, %v675
      %v679 = vadd.f32 %v657, 1.0
      %v680 = vadd.f32 %v664, 1.0
      %v681 = vadd.f32 %v671, 1.0
      %v682 = vadd.f32 %v678, 1.0
      %v683 = vlog2.pop %v679
      %v684 = vmul.f32 %v683, 0.6931472
      %v685 = vlog2.pop %v680
      %v686 = vmul.f32 %v685, 0.6931472
      %v687 = vlog2.pop %v681
      %v688 = vmul.f32 %v687, 0.6931472
      %v689 = vlog2.pop %v682
      %v690 = vmul.f32 %v689, 0.6931472
      %v691 = vand.u32 2147483647, %v627
      %v692 = vand.u32 2147483647, %v628
      %v693 = vand.u32 2147483647, %v629
      %v694 = vand.u32 2147483647, %v630
      %v695 = vand.u32 2147483647, %v635
      %v696 = vand.u32 2147483647, %v636
      %v697 = vand.u32 2147483647, %v637
      %v698 = vand.u32 2147483647, %v638
      %v699 = vmax.f32 %v691, %v695
      %v700 = vmax.f32 %v692, %v696
      %v701 = vmax.f32 %v693, %v697
      %v702 = vmax.f32 %v694, %v698
      %v703 = vmin.f32 %v691, %v695
      %v704 = vmin.f32 %v692, %v696
      %v705 = vmin.f32 %v693, %v697
      %v706 = vmin.f32 %v694, %v698
      %v707 = vmax.f32 %v699, 1e-30
      %v708 = vmax.f32 %v700, 1e-30
      %v709 = vmax.f32 %v701, 1e-30
      %v710 = vmax.f32 %v702, 1e-30
      %v711 = vrcp.pop %v707
      %v712 = vrcp.pop %v708
      %v713 = vrcp.pop %v709
      %v714 = vrcp.pop %v710
      %v715 = vmul.f32 %v703, %v711
      %v716 = vmul.f32 %v704, %v712
      %v717 = vmul.f32 %v705, %v713
      %v718 = vmul.f32 %v706, %v714
      %v719 = vmul.f32 %v715, %v715
      %v720 = vmul.f32 %v716, %v716
      %v721 = vmul.f32 %v717, %v717
      %v722 = vmul.f32 %v718, %v718
      %v723 = vmul.f32 %v719, -0.0046111774
      %v724 = vmul.f32 %v720, -0.0046111774
      %v725 = vmul.f32 %v721, -0.0046111774
      %v726 = vmul.f32 %v722, -0.0046111774
      %v727 = vadd.f32 %v723, 0.023870215
      %v728 = vadd.f32 %v724, 0.023870215
      %v729 = vadd.f32 %v725, 0.023870215
      %v730 = vadd.f32 %v726, 0.023870215
      %v731 = vmul.f32 %v727, %v719
      %v732 = vmul.f32 %v728, %v720
      %v733 = vmul.f32 %v729, %v721
      %v734 = vmul.f32 %v730, %v722
      %v735 = vadd.f32 %v731, -0.058803886
      %v736 = vadd.f32 %v732, -0.058803886
      %v737 = vadd.f32 %v733, -0.058803886
      %v738 = vadd.f32 %v734, -0.058803886
      %v739 = vmul.f32 %v735, %v719
      %v740 = vmul.f32 %v736, %v720
      %v741 = vmul.f32 %v737, %v721
      %v742 = vmul.f32 %v738, %v722
      %v743 = vadd.f32 %v739, 0.0985415
      %v744 = vadd.f32 %v740, 0.0985415
      %v745 = vadd.f32 %v741, 0.0985415
      %v746 = vadd.f32 %v742, 0.0985415
      %v747 = vmul.f32 %v743, %v719
      %v748 = vmul.f32 %v744, %v720
      %v749 = vmul.f32 %v745, %v721
      %v750 = vmul.f32 %v746, %v722
      %v751 = vadd.f32 %v747, -0.1399186
      %v752 = vadd.f32 %v748, -0.1399186
      %v753 = vadd.f32 %v749, -0.1399186
      %v754 = vadd.f32 %v750, -0.1399186
      %v755 = vmul.f32 %v751, %v719
      %v756 = vmul.f32 %v752, %v720
      %v757 = vmul.f32 %v753, %v721
      %v758 = vmul.f32 %v754, %v722
      %v759 = vadd.f32 %v755, 0.19963393
      %v760 = vadd.f32 %v756, 0.19963393
      %v761 = vadd.f32 %v757, 0.19963393
      %v762 = vadd.f32 %v758, 0.19963393
      %v763 = vmul.f32 %v759, %v719
      %v764 = vmul.f32 %v760, %v720
      %v765 = vmul.f32 %v761, %v721
      %v766 = vmul.f32 %v762, %v722
      %v767 = vadd.f32 %v763, -0.33331376
      %v768 = vadd.f32 %v764, -0.33331376
      %v769 = vadd.f32 %v765, -0.33331376
      %v770 = vadd.f32 %v766, -0.33331376
      %v771 = vmul.f32 %v767, %v719
      %v772 = vmul.f32 %v768, %v720
      %v773 = vmul.f32 %v769, %v721
      %v774 = vmul.f32 %v770, %v722
      %v775 = vadd.f32 %v771, 0.99999976
      %v776 = vadd.f32 %v772, 0.99999976
      %v777 = vadd.f32 %v773, 0.99999976
      %v778 = vadd.f32 %v774, 0.99999976
      %v779 = vmul.f32 %v715, %v775
      %v780 = vmul.f32 %v716, %v776
      %v781 = vmul.f32 %v717, %v777
      %v782 = vmul.f32 %v718, %v778
      %vm783 = vcmp.gt.f32.partialorder %v695, %v691
      %vm784 = vcmp.gt.f32.partialorder %v696, %v692
      %vm785 = vcmp.gt.f32.partialorder %v697, %v693
      %vm786 = vcmp.gt.f32.partialorder %v698, %v694
      %v787 = vsub.f32 1.5707964, %v779
      %v788 = vsub.f32 1.5707964, %v780
      %v789 = vsub.f32 1.5707964, %v781
      %v790 = vsub.f32 1.5707964, %v782
      %v791 = vsel %vm783, %v787, %v779
      %v792 = vsel %vm784, %v788, %v780
      %v793 = vsel %vm785, %v789, %v781
      %v794 = vsel %vm786, %v790, %v782
      %vm795 = vcmp.lt.f32.partialorder %v627, 0.0
      %vm796 = vcmp.lt.f32.partialorder %v628, 0.0
      %vm797 = vcmp.lt.f32.partialorder %v629, 0.0
      %vm798 = vcmp.lt.f32.partialorder %v630, 0.0
      %v799 = vsub.f32 3.1415927, %v791
      %v800 = vsub.f32 3.1415927, %v792
      %v801 = vsub.f32 3.1415927, %v793
      %v802 = vsub.f32 3.1415927, %v794
      %v803 = vsel %vm795, %v799, %v791
      %v804 = vsel %vm796, %v800, %v792
      %v805 = vsel %vm797, %v801, %v793
      %v806 = vsel %vm798, %v802, %v794
      %vm807 = vcmp.lt.f32.partialorder %v635, 0.0
      %vm808 = vcmp.lt.f32.partialorder %v636, 0.0
      %vm809 = vcmp.lt.f32.partialorder %v637, 0.0
      %vm810 = vcmp.lt.f32.partialorder %v638, 0.0
      %v811 = vsub.f32 0.0, %v803
      %v812 = vsub.f32 0.0, %v804
      %v813 = vsub.f32 0.0, %v805
      %v814 = vsub.f32 0.0, %v806
      %v815 = vsel %vm807, %v811, %v803
      %v816 = vsel %vm808, %v812, %v804
      %v817 = vsel %vm809, %v813, %v805
      %v818 = vsel %vm810, %v814, %v806
      %v819 = vpack.c.bf16 %v686, %v684
      %v820 = vpack.c.bf16 %v690, %v688
      %v821 = vld [vmem:[%s3] sm:$0xf]
      %v822 = vld [vmem:[%s3 + $0x4] sm:$0xf]
      %v823 = vld [vmem:[%s3 + $0x8] sm:$0xf]
      %v824 = vld [vmem:[%s3 + $0xc] sm:$0xf]
      %v825 = vld [vmem:[%s3 + $0x10] sm:$0xf]
      %v826 = vld [vmem:[%s3 + $0x14] sm:$0xf]
      %v827 = vld [vmem:[%s3 + $0x18] sm:$0xf]
      %v828 = vld [vmem:[%s3 + $0x1c] sm:$0xf]
      %v829 = vld [vmem:[%s3 + $0x20] sm:$0xf]
      %v830 = vld [vmem:[%s3 + $0x24] sm:$0xf]
      %v831 = vld [vmem:[%s3 + $0x28] sm:$0xf]
      %v832 = vld [vmem:[%s3 + $0x2c] sm:$0xf]
      %v833 = vld [vmem:[%s3 + $0x30] sm:$0xf]
      %v834 = vld [vmem:[%s3 + $0x34] sm:$0xf]
      %v835 = vld [vmem:[%s3 + $0x38] sm:$0xf]
      %v836 = vld [vmem:[%s3 + $0x3c] sm:$0xf]
      %v837 = vld [vmem:[%s4] sm:$0x1]
      %v839 = vlaneseq
      %v840 = vshrl.u32 %v839, 7
      %v841 = vsub.s32 0, %v840
      %v842 = vrot.slane %v837, %v841
      %v860 = vunpack.c.l.b16 %v821
      %v861 = vunpack.c.l.b16 %v822
      %v862 = vunpack.c.l.b16 %v823
      %v863 = vunpack.c.l.b16 %v824
      %v864 = vunpack.c.l.b16 %v825
      %v865 = vunpack.c.l.b16 %v826
      %v866 = vunpack.c.l.b16 %v827
      %v867 = vunpack.c.l.b16 %v828
      %v868 = vunpack.c.l.b16 %v829
      %v869 = vunpack.c.l.b16 %v830
      %v870 = vunpack.c.l.b16 %v831
      %v871 = vunpack.c.l.b16 %v832
      %v872 = vunpack.c.l.b16 %v833
      %v873 = vunpack.c.l.b16 %v834
      %v874 = vunpack.c.l.b16 %v835
      %v875 = vunpack.c.l.b16 %v836
      %v876 = vpack.c.b16 %v861, %v860
      %v877 = vpack.c.b16 %v863, %v862
      %v878 = vpack.c.b16 %v865, %v864
      %v879 = vpack.c.b16 %v867, %v866
      %v880 = vpack.c.b16 %v869, %v868
      %v881 = vpack.c.b16 %v871, %v870
      %v882 = vpack.c.b16 %v873, %v872
      %v883 = vpack.c.b16 %v875, %v874
      %892 = vmatprep.subr.bf16.mxu0 0
      %893 = vmatpush1.bf16.msra.mxu0 %v876
      %894 = vmatprep.subr.bf16.mxu0 0
      %895 = vmatpush1.bf16.msra.mxu0 %v877
      %896 = vmatprep.subr.bf16.mxu0 0
      %897 = vmatpush1.bf16.msra.mxu0 %v878
      %898 = vmatprep.subr.bf16.mxu0 0
      %899 = vmatpush1.bf16.msra.mxu0 %v879
      %900 = vmatprep.subr.bf16.mxu0 0
      %901 = vmatpush1.bf16.msra.mxu0 %v880
      %902 = vmatprep.subr.bf16.mxu0 0
      %903 = vmatpush1.bf16.msra.mxu0 %v881
      %904 = vmatprep.subr.bf16.mxu0 0
      %905 = vmatpush1.bf16.msra.mxu0 %v882
      %906 = vmatprep.subr.bf16.mxu0 0
      %907 = vmatpush1.bf16.msra.mxu0 %v883
      %908 = vmatprep.subr.bf16.mxu0 0
      %909 = vmatpush1.bf16.msra.mxu0 0
      %910 = vmatprep.subr.bf16.mxu0 0
      %911 = vmatpush1.bf16.msra.mxu0 0
      %912 = vmatprep.subr.bf16.mxu0 0
      %913 = vmatpush1.bf16.msra.mxu0 0
      %914 = vmatprep.subr.bf16.mxu0 0
      %915 = vmatpush1.bf16.msra.mxu0 0
      %916 = vmatprep.subr.bf16.mxu0 0
      %917 = vmatpush1.bf16.msra.mxu0 0
      %918 = vmatprep.subr.bf16.mxu0 0
      %919 = vmatpush1.bf16.msra.mxu0 0
      %920 = vmatprep.subr.bf16.mxu0 0
      %921 = vmatpush1.bf16.msra.mxu0 0
      %922 = vmatprep.subr.bf16.mxu0 0
      %923 = vmatpush1.bf16.msra.mxu0 0
      %924 = vmatprep.mubr.bf16.mxu0 0
      %925 = vmatmul.mubr.bf16.gmra.mrb[0].mxu0 %v819
      %v926 = vpop.f32.mrb[0].mxu0
      %v927 = vadd.f32 %v842, %v926
      %v928 = vpop.f32.mrb[0].mxu0
      %v929 = vpop.f32.mrb[0].mxu0
      %v930 = vadd.f32 %v842, %v929
      %v931 = vpop.f32.mrb[0].mxu0
      %932 = vmatprep.mubr.bf16.mxu0 0
      %933 = vmatmul.mubr.bf16.gmra.mrb[0].mxu0 %v820
      %v934 = vpop.f32.mrb[0].mxu0
      %v935 = vadd.f32 %v842, %v934
      %v936 = vpop.f32.mrb[0].mxu0
      %v937 = vpop.f32.mrb[0].mxu0
      %v938 = vadd.f32 %v842, %v937
      %v939 = vpop.f32.mrb[0].mxu0
      %940 = vdwg.mxu0
      %v941 = vmax.f32 %v927, 0.0
      %v942 = vmax.f32 %v930, 0.0
      %v943 = vmax.f32 %v935, 0.0
      %v944 = vmax.f32 %v938, 0.0
      %v945 = vpack.c.bf16 %v816, %v815
      %v946 = vpack.c.bf16 %v818, %v817
      %v947 = vld [vmem:[%s5] sm:$0xf]
      %v948 = vld [vmem:[%s5 + $0x4] sm:$0xf]
      %v949 = vld [vmem:[%s5 + $0x8] sm:$0xf]
      %v950 = vld [vmem:[%s5 + $0xc] sm:$0xf]
      %v951 = vld [vmem:[%s5 + $0x10] sm:$0xf]
      %v952 = vld [vmem:[%s5 + $0x14] sm:$0xf]
      %v953 = vld [vmem:[%s5 + $0x18] sm:$0xf]
      %v954 = vld [vmem:[%s5 + $0x1c] sm:$0xf]
      %v955 = vld [vmem:[%s5 + $0x20] sm:$0xf]
      %v956 = vld [vmem:[%s5 + $0x24] sm:$0xf]
      %v957 = vld [vmem:[%s5 + $0x28] sm:$0xf]
      %v958 = vld [vmem:[%s5 + $0x2c] sm:$0xf]
      %v959 = vld [vmem:[%s5 + $0x30] sm:$0xf]
      %v960 = vld [vmem:[%s5 + $0x34] sm:$0xf]
      %v961 = vld [vmem:[%s5 + $0x38] sm:$0xf]
      %v962 = vld [vmem:[%s5 + $0x3c] sm:$0xf]
      %v963 = vld [vmem:[%s6] sm:$0x1]
      %v965 = vlaneseq
      %v966 = vshrl.u32 %v965, 7
      %v967 = vsub.s32 0, %v966
      %v968 = vrot.slane %v963, %v967
      %v986 = vunpack.c.l.b16 %v947
      %v987 = vunpack.c.l.b16 %v948
      %v988 = vunpack.c.l.b16 %v949
      %v989 = vunpack.c.l.b16 %v950
      %v990 = vunpack.c.l.b16 %v951
      %v991 = vunpack.c.l.b16 %v952
      %v992 = vunpack.c.l.b16 %v953
      %v993 = vunpack.c.l.b16 %v954
      %v994 = vunpack.c.l.b16 %v955
      %v995 = vunpack.c.l.b16 %v956
      %v996 = vunpack.c.l.b16 %v957
      %v997 = vunpack.c.l.b16 %v958
      %v998 = vunpack.c.l.b16 %v959
      %v999 = vunpack.c.l.b16 %v960
      %v1000 = vunpack.c.l.b16 %v961
      %v1001 = vunpack.c.l.b16 %v962
      %v1002 = vpack.c.b16 %v987, %v986
      %v1003 = vpack.c.b16 %v989, %v988
      %v1004 = vpack.c.b16 %v991, %v990
      %v1005 = vpack.c.b16 %v993, %v992
      %v1006 = vpack.c.b16 %v995, %v994
      %v1007 = vpack.c.b16 %v997, %v996
      %v1008 = vpack.c.b16 %v999, %v998
      %v1009 = vpack.c.b16 %v1001, %v1000
      %1018 = vmatprep.subr.bf16.mxu0 0
      %1019 = vmatpush1.bf16.msra.mxu0 %v1002
      %1020 = vmatprep.subr.bf16.mxu0 0
      %1021 = vmatpush1.bf16.msra.mxu0 %v1003
      %1022 = vmatprep.subr.bf16.mxu0 0
      %1023 = vmatpush1.bf16.msra.mxu0 %v1004
      %1024 = vmatprep.subr.bf16.mxu0 0
      %1025 = vmatpush1.bf16.msra.mxu0 %v1005
      %1026 = vmatprep.subr.bf16.mxu0 0
      %1027 = vmatpush1.bf16.msra.mxu0 %v1006
      %1028 = vmatprep.subr.bf16.mxu0 0
      %1029 = vmatpush1.bf16.msra.mxu0 %v1007
      %1030 = vmatprep.subr.bf16.mxu0 0
      %1031 = vmatpush1.bf16.msra.mxu0 %v1008
      %1032 = vmatprep.subr.bf16.mxu0 0
      %1033 = vmatpush1.bf16.msra.mxu0 %v1009
      %1034 = vmatprep.subr.bf16.mxu0 0
      %1035 = vmatpush1.bf16.msra.mxu0 0
      %1036 = vmatprep.subr.bf16.mxu0 0
      %1037 = vmatpush1.bf16.msra.mxu0 0
      %1038 = vmatprep.subr.bf16.mxu0 0
      %1039 = vmatpush1.bf16.msra.mxu0 0
      %1040 = vmatprep.subr.bf16.mxu0 0
      %1041 = vmatpush1.bf16.msra.mxu0 0
      %1042 = vmatprep.subr.bf16.mxu0 0
      %1043 = vmatpush1.bf16.msra.mxu0 0
      %1044 = vmatprep.subr.bf16.mxu0 0
      %1045 = vmatpush1.bf16.msra.mxu0 0
      %1046 = vmatprep.subr.bf16.mxu0 0
      %1047 = vmatpush1.bf16.msra.mxu0 0
      %1048 = vmatprep.subr.bf16.mxu0 0
      %1049 = vmatpush1.bf16.msra.mxu0 0
      %1050 = vmatprep.mubr.bf16.mxu0 0
      %1051 = vmatmul.mubr.bf16.gmra.mrb[0].mxu0 %v945
      %v1052 = vpop.f32.mrb[0].mxu0
      %v1053 = vadd.f32 %v968, %v1052
      %v1054 = vpop.f32.mrb[0].mxu0
      %v1055 = vpop.f32.mrb[0].mxu0
      %v1056 = vadd.f32 %v968, %v1055
      %v1057 = vpop.f32.mrb[0].mxu0
      %1058 = vmatprep.mubr.bf16.mxu0 0
      %1059 = vmatmul.mubr.bf16.gmra.mrb[0].mxu0 %v946
      %v1060 = vpop.f32.mrb[0].mxu0
      %v1061 = vadd.f32 %v968, %v1060
      %v1062 = vpop.f32.mrb[0].mxu0
      %v1063 = vpop.f32.mrb[0].mxu0
      %v1064 = vadd.f32 %v968, %v1063
      %v1065 = vpop.f32.mrb[0].mxu0
      %1066 = vdwg.mxu0
      %v1067 = vxor.u32 %v1053, 2147483648
      %v1068 = vxor.u32 %v1056, 2147483648
      %v1069 = vxor.u32 %v1061, 2147483648
      %v1070 = vxor.u32 %v1064, 2147483648
      %v1071 = vmul.f32 %v1067, 1.442695
      %v1072 = vpow.pop %v1071
      %v1073 = vmul.f32 %v1068, 1.442695
      %v1074 = vpow.pop %v1073
      %v1075 = vmul.f32 %v1069, 1.442695
      %v1076 = vpow.pop %v1075
      %v1077 = vmul.f32 %v1070, 1.442695
      %v1078 = vpow.pop %v1077
      %v1079 = vadd.f32 %v1072, 1.0
      %v1080 = vadd.f32 %v1074, 1.0
      %v1081 = vadd.f32 %v1076, 1.0
      %v1082 = vadd.f32 %v1078, 1.0
      %v1083 = vrcp.pop %v1079
      %v1084 = vmul.f32 1.0, %v1083
      %v1085 = vrcp.pop %v1080
      %v1086 = vmul.f32 1.0, %v1085
      %v1087 = vrcp.pop %v1081
      %v1088 = vmul.f32 1.0, %v1087
      %v1089 = vrcp.pop %v1082
      %v1090 = vmul.f32 1.0, %v1089
      %v1091 = vmul.f32 %v1084, %v1084
      %v1092 = vmul.f32 %v1086, %v1086
      %v1093 = vmul.f32 %v1088, %v1088
      %v1094 = vmul.f32 %v1090, %v1090
      %v1095 = vmul.f32 %v1091, 2.4801588e-05
      %v1096 = vmul.f32 %v1092, 2.4801588e-05
      %v1097 = vmul.f32 %v1093, 2.4801588e-05
      %v1098 = vmul.f32 %v1094, 2.4801588e-05
      %v1099 = vadd.f32 %v1095, -0.0013888889
      %v1100 = vadd.f32 %v1096, -0.0013888889
      %v1101 = vadd.f32 %v1097, -0.0013888889
      %v1102 = vadd.f32 %v1098, -0.0013888889
      %v1103 = vmul.f32 %v1091, %v1099
      %v1104 = vmul.f32 %v1092, %v1100
      %v1105 = vmul.f32 %v1093, %v1101
      %v1106 = vmul.f32 %v1094, %v1102
      %v1107 = vadd.f32 %v1103, 0.041666668
      %v1108 = vadd.f32 %v1104, 0.041666668
      %v1109 = vadd.f32 %v1105, 0.041666668
      %v1110 = vadd.f32 %v1106, 0.041666668
      %v1111 = vmul.f32 %v1091, %v1107
      %v1112 = vmul.f32 %v1092, %v1108
      %v1113 = vmul.f32 %v1093, %v1109
      %v1114 = vmul.f32 %v1094, %v1110
      %v1115 = vadd.f32 %v1111, -0.5
      %v1116 = vadd.f32 %v1112, -0.5
      %v1117 = vadd.f32 %v1113, -0.5
      %v1118 = vadd.f32 %v1114, -0.5
      %v1119 = vmul.f32 %v1091, %v1115
      %v1120 = vmul.f32 %v1092, %v1116
      %v1121 = vmul.f32 %v1093, %v1117
      %v1122 = vmul.f32 %v1094, %v1118
      %v1123 = vadd.f32 %v1119, 1.0
      %v1124 = vadd.f32 %v1120, 1.0
      %v1125 = vadd.f32 %v1121, 1.0
      %v1126 = vadd.f32 %v1122, 1.0
      %v1127 = vmul.f32 %v941, %v1123
      %v1128 = vmul.f32 %v942, %v1124
      %v1129 = vmul.f32 %v943, %v1125
      %v1130 = vmul.f32 %v944, %v1126
      %v1131 = vpack.c.bf16 %v1128, %v1127
      %v1132 = vpack.c.bf16 %v1130, %v1129
      %v1133 = vmul.f32 %v1091, 2.7557319e-06
      %v1134 = vmul.f32 %v1092, 2.7557319e-06
      %v1135 = vmul.f32 %v1093, 2.7557319e-06
      %v1136 = vmul.f32 %v1094, 2.7557319e-06
      %v1137 = vadd.f32 %v1133, -0.0001984127
      %v1138 = vadd.f32 %v1134, -0.0001984127
      %v1139 = vadd.f32 %v1135, -0.0001984127
      %v1140 = vadd.f32 %v1136, -0.0001984127
      %v1141 = vmul.f32 %v1091, %v1137
      %v1142 = vmul.f32 %v1092, %v1138
      %v1143 = vmul.f32 %v1093, %v1139
      %v1144 = vmul.f32 %v1094, %v1140
      %v1145 = vadd.f32 %v1141, 0.008333334
      %v1146 = vadd.f32 %v1142, 0.008333334
      %v1147 = vadd.f32 %v1143, 0.008333334
      %v1148 = vadd.f32 %v1144, 0.008333334
      %v1149 = vmul.f32 %v1091, %v1145
      %v1150 = vmul.f32 %v1092, %v1146
      %v1151 = vmul.f32 %v1093, %v1147
      %v1152 = vmul.f32 %v1094, %v1148
      %v1153 = vadd.f32 %v1149, -0.16666667
      %v1154 = vadd.f32 %v1150, -0.16666667
      %v1155 = vadd.f32 %v1151, -0.16666667
      %v1156 = vadd.f32 %v1152, -0.16666667
      %v1157 = vmul.f32 %v1091, %v1153
      %v1158 = vmul.f32 %v1092, %v1154
      %v1159 = vmul.f32 %v1093, %v1155
      %v1160 = vmul.f32 %v1094, %v1156
      %v1161 = vadd.f32 %v1157, 1.0
      %v1162 = vadd.f32 %v1158, 1.0
      %v1163 = vadd.f32 %v1159, 1.0
      %v1164 = vadd.f32 %v1160, 1.0
      %v1165 = vmul.f32 %v1084, %v1161
      %v1166 = vmul.f32 %v1086, %v1162
      %v1167 = vmul.f32 %v1088, %v1163
      %v1168 = vmul.f32 %v1090, %v1164
      %v1169 = vmul.f32 %v941, %v1165
      %v1170 = vmul.f32 %v942, %v1166
      %v1171 = vmul.f32 %v943, %v1167
      %v1172 = vmul.f32 %v944, %v1168
      %v1173 = vpack.c.bf16 %v1170, %v1169
      %v1174 = vpack.c.bf16 %v1172, %v1171
      %1175 = vmatprep.subr.bf16.mxu0 %v1173
      %1176 = vmatpush1.bf16.msra.mxu0 %v1131
      %1177 = vmatprep.subr.bf16.mxu0 %v1174
      %1178 = vmatpush1.bf16.msra.mxu0 %v1132
      %1179 = vmatprep.subr.bf16.mxu0 0
      %1180 = vmatpush1.bf16.msra.mxu0 0
      %1181 = vmatprep.subr.bf16.mxu0 0
      %1182 = vmatpush1.bf16.msra.mxu0 0
      %1183 = vmatprep.subr.bf16.mxu0 0
      %1184 = vmatpush1.bf16.msra.mxu0 0
      %1185 = vmatprep.subr.bf16.mxu0 0
      %1186 = vmatpush1.bf16.msra.mxu0 0
      %1187 = vmatprep.subr.bf16.mxu0 0
      %1188 = vmatpush1.bf16.msra.mxu0 0
      %1189 = vmatprep.subr.bf16.mxu0 0
      %1190 = vmatpush1.bf16.msra.mxu0 0
      %1191 = vmatprep.subr.bf16.mxu0 0
      %1192 = vmatpush1.bf16.msra.mxu0 0
      %1193 = vmatprep.subr.bf16.mxu0 0
      %1194 = vmatpush1.bf16.msra.mxu0 0
      %1195 = vmatprep.subr.bf16.mxu0 0
      %1196 = vmatpush1.bf16.msra.mxu0 0
      %1197 = vmatprep.subr.bf16.mxu0 0
      %1198 = vmatpush1.bf16.msra.mxu0 0
      %1199 = vmatprep.subr.bf16.mxu0 0
      %1200 = vmatpush1.bf16.msra.mxu0 0
      %1201 = vmatprep.subr.bf16.mxu0 0
      %1202 = vmatpush1.bf16.msra.mxu0 0
      %1203 = vmatprep.subr.bf16.mxu0 0
      %1204 = vmatpush1.bf16.msra.mxu0 0
      %1205 = vmatprep.subr.bf16.mxu0 0
      %1206 = vmatpush1.bf16.msra.mxu0 0
      %1207 = vmatprep.mubr.bf16.mxu0 0
      %1208 = vmatmul.mubr.bf16.gmra.mrb[0].mxu0 %v394
      %v1209 = vpop.f32.mrb[0].mxu0
      %v1210 = vadd.f32 0.0, %v1209
      %v1211 = vpop.f32.mrb[0].mxu0
      %v1212 = vadd.f32 0.0, %v1211
      %v1213 = vpop.f32.mrb[0].mxu0
      %v1214 = vadd.f32 0.0, %v1213
      %v1215 = vpop.f32.mrb[0].mxu0
      %v1216 = vadd.f32 0.0, %v1215
      %1217 = vmatprep.mubr.bf16.mxu0 0
      %1218 = vmatmul.mubr.bf16.gmra.mrb[0].mxu0 %v397
      %v1219 = vpop.f32.mrb[0].mxu0
      %v1220 = vadd.f32 0.0, %v1219
      %v1221 = vpop.f32.mrb[0].mxu0
      %v1222 = vadd.f32 0.0, %v1221
      %v1223 = vpop.f32.mrb[0].mxu0
      %v1224 = vadd.f32 0.0, %v1223
      %v1225 = vpop.f32.mrb[0].mxu0
      %v1226 = vadd.f32 0.0, %v1225
      %1227 = vmatprep.mubr.bf16.mxu0 0
      %1228 = vmatmul.mubr.bf16.gmra.mrb[0].mxu0 %v400
      %v1229 = vpop.f32.mrb[0].mxu0
      %v1230 = vadd.f32 0.0, %v1229
      %v1231 = vpop.f32.mrb[0].mxu0
      %v1232 = vadd.f32 0.0, %v1231
      %v1233 = vpop.f32.mrb[0].mxu0
      %v1234 = vadd.f32 0.0, %v1233
      %v1235 = vpop.f32.mrb[0].mxu0
      %v1236 = vadd.f32 0.0, %v1235
      %1237 = vmatprep.mubr.bf16.mxu0 0
      %1238 = vmatmul.mubr.bf16.gmra.mrb[0].mxu0 %v403
      %v1239 = vpop.f32.mrb[0].mxu0
      %v1240 = vadd.f32 0.0, %v1239
      %v1241 = vpop.f32.mrb[0].mxu0
      %v1242 = vadd.f32 0.0, %v1241
      %v1243 = vpop.f32.mrb[0].mxu0
      %v1244 = vadd.f32 0.0, %v1243
      %v1245 = vpop.f32.mrb[0].mxu0
      %v1246 = vadd.f32 0.0, %v1245
      %1247 = vdwg.mxu0
      %v1248 = vsub.f32 %v1210, %v1232
      %v1249 = vsub.f32 %v1214, %v1236
      %v1250 = vsub.f32 %v1220, %v1242
      %v1251 = vsub.f32 %v1224, %v1246
      %v1252 = vadd.f32 %v1212, %v1230
      %v1253 = vadd.f32 %v1216, %v1234
      %v1254 = vadd.f32 %v1222, %v1240
      %v1255 = vadd.f32 %v1226, %v1244
      %v1256 = vsub.f32 0.0, %v1252
      %v1257 = vsub.f32 0.0, %v1253
      %v1258 = vsub.f32 0.0, %v1254
      %v1259 = vsub.f32 0.0, %v1255
      %v1260 = vpack.c.bf16 %v1249, %v1248
      %v1261 = vpack.c.bf16 %v1251, %v1250
      %v1262 = vpack.c.bf16 %v1257, %v1256
      %v1263 = vpack.c.bf16 %v1259, %v1258
      %1264 = vmatprep.subr.bf16.mxu0 %v523
      %1265 = vmatpush1.bf16.xpose.msra.mxu0 %v522
      %1266 = vmatprep.subr.bf16.mxu0 %v525
      %1267 = vmatpush1.bf16.xpose.msra.mxu0 %v524
      %1268 = vmatprep.subr.bf16.mxu0 %v527
      %1269 = vmatpush1.bf16.xpose.msra.mxu0 %v526
      %1270 = vmatprep.subr.bf16.mxu0 %v529
      %1271 = vmatpush1.bf16.xpose.msra.mxu0 %v528
      %1272 = vmatprep.subr.bf16.mxu0 %v531
      %1273 = vmatpush1.bf16.xpose.msra.mxu0 %v530
      %1274 = vmatprep.subr.bf16.mxu0 %v533
      %1275 = vmatpush1.bf16.xpose.msra.mxu0 %v532
      %1276 = vmatprep.subr.bf16.mxu0 %v535
      %1277 = vmatpush1.bf16.xpose.msra.mxu0 %v534
      %1278 = vmatprep.subr.bf16.mxu0 %v537
      %1279 = vmatpush1.bf16.xpose.msra.mxu0 %v536
      %1280 = vmatprep.subr.bf16.mxu0 0
      %1281 = vmatpush1.bf16.xpose.msra.mxu0 0
      %1282 = vmatprep.subr.bf16.mxu0 0
      %1283 = vmatpush1.bf16.xpose.msra.mxu0 0
      %1284 = vmatprep.subr.bf16.mxu0 0
      %1285 = vmatpush1.bf16.xpose.msra.mxu0 0
      %1286 = vmatprep.subr.bf16.mxu0 0
      %1287 = vmatpush1.bf16.xpose.msra.mxu0 0
      %1288 = vmatprep.subr.bf16.mxu0 0
      %1289 = vmatpush1.bf16.xpose.msra.mxu0 0
      %1290 = vmatprep.subr.bf16.mxu0 0
      %1291 = vmatpush1.bf16.xpose.msra.mxu0 0
      %1292 = vmatprep.subr.bf16.mxu0 0
      %1293 = vmatpush1.bf16.xpose.msra.mxu0 0
      %1294 = vmatprep.subr.bf16.mxu0 0
      %1295 = vmatpush1.bf16.xpose.msra.mxu0 0
      %1296 = vmatprep.mubr.bf16.mxu0 %v1262
      %1297 = vmatmul.mubr.bf16.gmra.mrb[0].mxu0 %v1260
      %v1298 = vpop.f32.mrb[0].mxu0
      %v1299 = vadd.f32 %v342, %v1298
      %v1300 = vpop.f32.mrb[0].mxu0
      %v1301 = vpop.f32.mrb[0].mxu0
      %v1302 = vadd.f32 %v343, %v1301
      %v1303 = vpop.f32.mrb[0].mxu0
      %1304 = vmatprep.mubr.bf16.mxu0 %v1263
      %1305 = vmatmul.mubr.bf16.gmra.mrb[0].mxu0 %v1261
      %v1306 = vpop.f32.mrb[0].mxu0
      %v1307 = vadd.f32 %v344, %v1306
      %v1308 = vpop.f32.mrb[0].mxu0
      %v1309 = vpop.f32.mrb[0].mxu0
      %v1310 = vadd.f32 %v345, %v1309
      %v1311 = vpop.f32.mrb[0].mxu0
      %1312 = vdwg.mxu0
      %v1313 = vpack.c.bf16 %v1302, %v1299
      %v1314 = vpack.c.bf16 %v1310, %v1307
      %v1315 = vld [vmem:[%s7] sm:$0xf]
      %v1316 = vld [vmem:[%s7 + $0x4] sm:$0xf]
      %v1317 = vld [vmem:[%s7 + $0x8] sm:$0xf]
      %v1318 = vld [vmem:[%s7 + $0xc] sm:$0xf]
      %v1319 = vld [vmem:[%s7 + $0x10] sm:$0xf]
      %v1320 = vld [vmem:[%s7 + $0x14] sm:$0xf]
      %v1321 = vld [vmem:[%s7 + $0x18] sm:$0xf]
      %v1322 = vld [vmem:[%s7 + $0x1c] sm:$0xf]
      %v1323 = vld [vmem:[%s7 + $0x20] sm:$0xf]
      %v1324 = vld [vmem:[%s7 + $0x24] sm:$0xf]
      %v1325 = vld [vmem:[%s7 + $0x28] sm:$0xf]
      %v1326 = vld [vmem:[%s7 + $0x2c] sm:$0xf]
      %v1327 = vld [vmem:[%s7 + $0x30] sm:$0xf]
      %v1328 = vld [vmem:[%s7 + $0x34] sm:$0xf]
      %v1329 = vld [vmem:[%s7 + $0x38] sm:$0xf]
      %v1330 = vld [vmem:[%s7 + $0x3c] sm:$0xf]
      %v1331 = vld [vmem:[%s8] sm:$0x1]
      %v1333 = vlaneseq
      %v1334 = vshrl.u32 %v1333, 7
      %v1335 = vsub.s32 0, %v1334
      %v1336 = vrot.slane %v1331, %v1335
      %v1354 = vunpack.c.l.b16 %v1315
      %v1355 = vunpack.c.l.b16 %v1316
      %v1356 = vunpack.c.l.b16 %v1317
      %v1357 = vunpack.c.l.b16 %v1318
      %v1358 = vunpack.c.l.b16 %v1319
      %v1359 = vunpack.c.l.b16 %v1320
      %v1360 = vunpack.c.l.b16 %v1321
      %v1361 = vunpack.c.l.b16 %v1322
      %v1362 = vunpack.c.l.b16 %v1323
      %v1363 = vunpack.c.l.b16 %v1324
      %v1364 = vunpack.c.l.b16 %v1325
      %v1365 = vunpack.c.l.b16 %v1326
      %v1366 = vunpack.c.l.b16 %v1327
      %v1367 = vunpack.c.l.b16 %v1328
      %v1368 = vunpack.c.l.b16 %v1329
      %v1369 = vunpack.c.l.b16 %v1330
      %v1370 = vpack.c.b16 %v1355, %v1354
      %v1371 = vpack.c.b16 %v1357, %v1356
      %v1372 = vpack.c.b16 %v1359, %v1358
      %v1373 = vpack.c.b16 %v1361, %v1360
      %v1374 = vpack.c.b16 %v1363, %v1362
      %v1375 = vpack.c.b16 %v1365, %v1364
      %v1376 = vpack.c.b16 %v1367, %v1366
      %v1377 = vpack.c.b16 %v1369, %v1368
      %1386 = vmatprep.subr.bf16.mxu0 0
      %1387 = vmatpush1.bf16.msra.mxu0 %v1370
      %1388 = vmatprep.subr.bf16.mxu0 0
      %1389 = vmatpush1.bf16.msra.mxu0 %v1371
      %1390 = vmatprep.subr.bf16.mxu0 0
      %1391 = vmatpush1.bf16.msra.mxu0 %v1372
      %1392 = vmatprep.subr.bf16.mxu0 0
      %1393 = vmatpush1.bf16.msra.mxu0 %v1373
      %1394 = vmatprep.subr.bf16.mxu0 0
      %1395 = vmatpush1.bf16.msra.mxu0 %v1374
      %1396 = vmatprep.subr.bf16.mxu0 0
      %1397 = vmatpush1.bf16.msra.mxu0 %v1375
      %1398 = vmatprep.subr.bf16.mxu0 0
      %1399 = vmatpush1.bf16.msra.mxu0 %v1376
      %1400 = vmatprep.subr.bf16.mxu0 0
      %1401 = vmatpush1.bf16.msra.mxu0 %v1377
      %1402 = vmatprep.subr.bf16.mxu0 0
      %1403 = vmatpush1.bf16.msra.mxu0 0
      %1404 = vmatprep.subr.bf16.mxu0 0
      %1405 = vmatpush1.bf16.msra.mxu0 0
      %1406 = vmatprep.subr.bf16.mxu0 0
      %1407 = vmatpush1.bf16.msra.mxu0 0
      %1408 = vmatprep.subr.bf16.mxu0 0
      %1409 = vmatpush1.bf16.msra.mxu0 0
      %1410 = vmatprep.subr.bf16.mxu0 0
      %1411 = vmatpush1.bf16.msra.mxu0 0
      %1412 = vmatprep.subr.bf16.mxu0 0
      %1413 = vmatpush1.bf16.msra.mxu0 0
      %1414 = vmatprep.subr.bf16.mxu0 0
      %1415 = vmatpush1.bf16.msra.mxu0 0
      %1416 = vmatprep.subr.bf16.mxu0 0
      %1417 = vmatpush1.bf16.msra.mxu0 0
      %1418 = vmatprep.mubr.bf16.mxu0 0
      %1419 = vmatmul.mubr.bf16.gmra.mrb[0].mxu0 %v1313
      %v1420 = vpop.f32.mrb[0].mxu0
      %v1421 = vadd.f32 %v1336, %v1420
      %v1422 = vpop.f32.mrb[0].mxu0
      %v1423 = vpop.f32.mrb[0].mxu0
      %v1424 = vadd.f32 %v1336, %v1423
      %v1425 = vpop.f32.mrb[0].mxu0
      %1426 = vmatprep.mubr.bf16.mxu0 0
      %1427 = vmatmul.mubr.bf16.gmra.mrb[0].mxu0 %v1314
      %v1428 = vpop.f32.mrb[0].mxu0
      %v1429 = vadd.f32 %v1336, %v1428
      %v1430 = vpop.f32.mrb[0].mxu0
      %v1431 = vpop.f32.mrb[0].mxu0
      %v1432 = vadd.f32 %v1336, %v1431
      %v1433 = vpop.f32.mrb[0].mxu0
      %1434 = vdwg.mxu0
      %1435 = vst [vmem:[%s339] sm:$0xff] %v1421
      %1436 = vst [vmem:[%s339 + $0x8] sm:$0xff] %v1424
      %1437 = vst [vmem:[%s339 + $0x10] sm:$0xff] %v1429
      %1438 = vst [vmem:[%s339 + $0x18] sm:$0xff] %v1432
      %s1439 = smul.u32 2, %s20
      %p1440 = scmp.lt.s32.totalorder %s1439, 3
      %s1441 = scalar_select %p1440, %s1439, 3
      %s1442 = smul.addr %s1441, 2
      %s1443 = smul.addr %s1442, 8
      %s1444 = scalar_lea.vmem %s9, %s1443
      // Predicated region
      $region57: #{fpsa_forward.1} parent=55 // pred_check
        %p1445 = pneg %p232
      $region58: #{fpsa_forward.1} parent=55 // pred_check_branch
        %1447 = sbr.rel (%p1445) target = $region60
      $region59: #{fpsa_forward.1} parent=55 // pred_region
        %s1448 = smul.u32 2, %s20
      $region60: #{fpsa_forward.1} parent=55 // pred_fallthru
        _
    $region56: #{fpsa_forward.1} parent=5 // pred_fallthru
      _
    %p1449 = scmp.le.s32.totalorder 2, %s15
    // Predicated region
    $region61: #{fpsa_forward.1} parent=5 // pred_check
      %p1450 = pneg %p1449
    $region62: #{fpsa_forward.1} parent=5 // pred_check_branch
      %1452 = sbr.rel (%p1450) target = $region64
    $region63: #{fpsa_forward.1} parent=5 // pred_region
      %s1453 = ssub.s32 %s15, 2
      // Predicated region
      $region65: #{fpsa_forward.1} parent=63 // pred_check
        %p1454 = pneg %p238
      $region66: #{fpsa_forward.1} parent=63 // pred_check_branch
        %1456 = sbr.rel (%p1454) target = $region68
      $region67: #{fpsa_forward.1} parent=63 // pred_region
        %s1457 = smul.u32 2, %s21
        %p1458 = scmp.lt.s32.totalorder %s1457, 3
        %s1459 = scalar_select %p1458, %s1457, 3
        %s1460 = smul.addr %s1459, 2
        %s1461 = smul.addr %s1460, 8
        %s1462 = scalar_lea.vmem %s9, %s1461
      $region68: #{fpsa_forward.1} parent=63 // pred_fallthru
        _
    $region64: #{fpsa_forward.1} parent=5 // pred_fallthru
      _
  $region6: #{fpsa_forward.1} parent=0 // loop_footer
    %s19 = sadd.s32 1, %s15
  $region7: #{fpsa_forward.1} parent=0 // loop_footer_branch
    %14 = sbr.rel target = $region3
  $region8: #{fpsa_forward.1} parent=0 // loop_exit
    _

</llo_original>
